<compile_context>
chip_gen: v7x
topology: tpu7x:2x2x1
jax: 0.10.0
libtpu: 0.0.40
codegen_flags: <defaults>
</compile_context>

<pallas_src>
import jax
import jax.numpy as jnp
from jax.experimental import pallas as pl
from jax.experimental.pallas import tpu as pltpu

LANE = 128        # TPU lane width: feature dims padded to multiples of this.
ROW_ALIGN = 16    # bf16 min sublane tile: batch tiles are multiples of 16.


def _round_up(x, m):
    return (x + m - 1) // m * m


# ----------------------------------------------------------------------------
# Kernel
# ----------------------------------------------------------------------------
def _vae_kernel(x_ref, eps_ref,
                w1_ref, b1_ref,
                wml_ref, bml_ref,
                w3_ref, b3_ref,
                w4_ref, b4_ref,
                xrec_ref, ml_ref):
    lat_p = eps_ref.shape[-1]

    # ---- Encoder hidden layer (bf16 MXU operands, f32 accumulation) ----
    h = jnp.dot(x_ref[...], w1_ref[...],
                preferred_element_type=jnp.float32) + b1_ref[...]
    h = jnp.maximum(h, 0.0)

    # ---- Fused mean|logvar head: one matmul, one lane-dense packed output ----
    ml = jnp.dot(h.astype(jnp.bfloat16), wml_ref[...],
                 preferred_element_type=jnp.float32) + bml_ref[...]
    mean = ml[:, :lat_p]            # 128-lane aligned slices (no relayout)
    logvar = ml[:, lat_p:]

    # ---- Reparameterize (f32 on VPU/EUP; v5e has no bf16 elementwise path) ----
    z = mean + eps_ref[...] * jnp.exp(0.5 * logvar)

    # ---- Decoder ----
    h2 = jnp.dot(z.astype(jnp.bfloat16), w3_ref[...],
                 preferred_element_type=jnp.float32) + b3_ref[...]
    h2 = jnp.maximum(h2, 0.0)
    logits = jnp.dot(h2.astype(jnp.bfloat16), w4_ref[...],
                     preferred_element_type=jnp.float32) + b4_ref[...]

    xrec_ref[...] = jax.nn.sigmoid(logits).astype(xrec_ref.dtype)
    ml_ref[...] = ml.astype(ml_ref.dtype)


# ----------------------------------------------------------------------------
# Parameter packing: pad to 128 lanes, fuse Wm|Wv, cast matmul weights to bf16
# ----------------------------------------------------------------------------
def pack_params(params, input_dim, hidden_dim, latent_dim):
    in_p = _round_up(input_dim, LANE)
    hid_p = _round_up(hidden_dim, LANE)
    lat_p = _round_up(latent_dim, LANE)

    def pad_w(w, rows, cols):
        full = jnp.zeros((rows, cols), jnp.float32)
        full = full.at[: w.shape[0], : w.shape[1]].set(w)
        return full.astype(jnp.bfloat16)

    def pad_b(b, cols):
        full = jnp.zeros((1, cols), jnp.float32)
        return full.at[:, : b.shape[1]].set(b)

    wml = jnp.concatenate(
        [pad_w(params["wm"], hid_p, lat_p),
         pad_w(params["wv"], hid_p, lat_p)], axis=1)
    bml = jnp.concatenate(
        [pad_b(params["bm"], lat_p), pad_b(params["bv"], lat_p)], axis=1)

    return dict(
        w1=pad_w(params["w1"], in_p, hid_p), b1=pad_b(params["b1"], hid_p),
        wml=wml, bml=bml,
        w3=pad_w(params["w3"], lat_p, hid_p), b3=pad_b(params["b3"], hid_p),
        w4=pad_w(params["w4"], hid_p, in_p), b4=pad_b(params["b4"], in_p),
    )


# ----------------------------------------------------------------------------
# Per-generation configuration and batch-tile selection
# ----------------------------------------------------------------------------
def _chip_config():
    """Returns (mxu_rows, vmem_budget_bytes, tensorcores_per_chip)."""
    kind = ""
    try:
        kind = jax.devices()[0].device_kind.lower()
    except Exception:
        pass
    if "v7" in kind:
        return 256, 48 * 2**20, 2      # 64 MiB physical VMEM per TC, 2 TCs
    if any(v in kind for v in ("v2", "v3", "v4", "v5")):
        return 128, 56 * 2**20, 1      # 128-wide MXU generations
    return 256, 56 * 2**20, 1          # v6e and unknown default


def _select_tile_b(batch, in_p, hid_p, lat_p, weight_bytes):
    """Pick (tile_b, padded_batch) for the 1-D batch grid."""
    mxu_rows, vmem_budget, num_tc = _chip_config()
    b_min = _round_up(max(batch, ROW_ALIGN), ROW_ALIGN)

    # Per-batch-row VMEM bytes of the pipelined tiles:
    #   inputs  (x bf16 + eps f32), double-buffered
    #   outputs (x_recon f32 + mean|logvar f32), double-buffered
    #   + f32 activation working set (h, ml, z, h2, logits).
    row_bytes = (2 * (2 * in_p + 4 * lat_p)
                 + 2 * (4 * in_p + 8 * lat_p)
                 + 4 * (2 * hid_p + 3 * lat_p + in_p))
    avail = vmem_budget - 2 * weight_bytes      # conservative (2 weight bufs)
    rows_fit = ROW_ALIGN
    if avail > row_bytes * ROW_ALIGN:
        rows_fit = (avail // row_bytes) // ROW_ALIGN * ROW_ALIGN

    # Small batch: one full tile -> single grid step, no pipeline overhead.
    if b_min <= mxu_rows and b_min <= rows_fit:
        return b_min, b_min

    # Generation target: 128 rows on 128-wide-MXU chips, up to 512 rows on
    # v6e/v7x (bigger tiles get closer to the HBM streaming roofline).
    target = 128 if mxu_rows == 128 else 512
    tile = max(ROW_ALIGN, min(b_min, target, rows_fit))

    # v7x megacore: keep >= 2 grid steps so both TensorCores get work.
    if num_tc >= 2 and b_min > mxu_rows:
        half = _round_up((b_min + 1) // 2, mxu_rows)
        tile = min(tile, max(mxu_rows, half))

    tile = max(ROW_ALIGN, tile // ROW_ALIGN * ROW_ALIGN)
    return tile, _round_up(b_min, tile)


# ----------------------------------------------------------------------------
# Wrapper
# ----------------------------------------------------------------------------
def vae_forward(x, eps, kp, *, tile_b=None):
    """x: [batch, input_dim] f32; eps: [batch, latent_dim] f32 reparam noise."""
    batch, input_dim = x.shape
    latent_dim = eps.shape[1]

    in_p, hid_p = kp["w1"].shape
    lat_p = kp["w3"].shape[0]

    weight_bytes = sum(int(v.size) * v.dtype.itemsize for v in kp.values())

    if tile_b is None:
        tile_b, b_pad = _select_tile_b(batch, in_p, hid_p, lat_p, weight_bytes)
    else:
        tile_b = max(ROW_ALIGN, _round_up(tile_b, ROW_ALIGN))
        b_pad = _round_up(max(batch, tile_b), tile_b)
    grid = (b_pad // tile_b,)

    # Pad inputs to lane-dense, tile-aligned slabs only when actually needed:
    # the pad is an extra HBM round trip, so aligned inputs skip it entirely.
    if (batch, input_dim) == (b_pad, in_p) and x.dtype == jnp.bfloat16:
        x_p = x
    else:
        x_p = jnp.zeros((b_pad, in_p), jnp.bfloat16)
        x_p = x_p.at[:batch, :input_dim].set(x.astype(jnp.bfloat16))
    if (batch, latent_dim) == (b_pad, lat_p) and eps.dtype == jnp.float32:
        eps_p = eps
    else:
        eps_p = jnp.zeros((b_pad, lat_p), jnp.float32)
        eps_p = eps_p.at[:batch, :latent_dim].set(eps.astype(jnp.float32))

    batch_spec = lambda shape: pl.BlockSpec(shape, lambda b: (b, 0))

    out_specs = (
        batch_spec((tile_b, in_p)),            # x_recon (padded)
        batch_spec((tile_b, 2 * lat_p)),       # packed mean|logvar (padded)
    )
    out_shape = (
        jax.ShapeDtypeStruct((b_pad, in_p), jnp.float32),
        jax.ShapeDtypeStruct((b_pad, 2 * lat_p), jnp.float32),
    )

    # Cost estimate so XLA can schedule around the custom call.
    flops = 2 * b_pad * (in_p * hid_p + hid_p * 2 * lat_p
                         + lat_p * hid_p + hid_p * in_p)
    transcendentals = b_pad * (lat_p + in_p)        # exp (reparam) + sigmoid
    io_bytes = (int(x_p.size) * 2 + int(eps_p.size) * 4
                + b_pad * in_p * 4 + b_pad * 2 * lat_p * 4)

    _, vmem_budget, _ = _chip_config()

    def run(single_buffer_weights):
        if single_buffer_weights:
            w_bufs = 1
            # Constant index_map -> the block never changes; one buffer is
            # enough and halves the weights' VMEM footprint.
            weight_spec = lambda shape: pl.BlockSpec(
                shape, lambda b: (0, 0), pipeline_mode=pl.Buffered(1))
        else:
            w_bufs = 2
            weight_spec = lambda shape: pl.BlockSpec(shape, lambda b: (0, 0))

        in_specs = [
            batch_spec((tile_b, in_p)),            # x
            batch_spec((tile_b, lat_p)),           # eps
            weight_spec((in_p, hid_p)),            # w1
            weight_spec((1, hid_p)),               # b1
            weight_spec((hid_p, 2 * lat_p)),       # wml = [Wm | Wv]
            weight_spec((1, 2 * lat_p)),           # bml
            weight_spec((lat_p, hid_p)),           # w3
            weight_spec((1, hid_p)),               # b3
            weight_spec((hid_p, in_p)),            # w4
            weight_spec((1, in_p)),                # b4
        ]

        # Actual VMEM footprint + 25% headroom, capped at the per-chip budget.
        tile_in = tile_b * (2 * in_p + 4 * lat_p)
        tile_out = tile_b * (4 * in_p + 8 * lat_p)
        act = tile_b * 4 * (2 * hid_p + 3 * lat_p + in_p)
        need = w_bufs * weight_bytes + 2 * tile_in + 2 * tile_out + act
        vmem_limit = int(max(16 * 2**20, min(vmem_budget, (need * 5) // 4)))

        return pl.pallas_call(
            _vae_kernel,
            out_shape=out_shape,
            grid_spec=pltpu.PrefetchScalarGridSpec(
                num_scalar_prefetch=0,
                grid=grid,
                in_specs=in_specs,
                out_specs=out_specs,
            ),
            compiler_params=pltpu.CompilerParams(
                dimension_semantics=("parallel",),
                vmem_limit_bytes=vmem_limit,
            ),
            cost_estimate=pl.CostEstimate(
                flops=int(flops),
                transcendentals=int(transcendentals),
                bytes_accessed=int(weight_bytes + io_bytes),
            ),
        )(x_p, eps_p,
          kp["w1"], kp["b1"], kp["wml"], kp["bml"],
          kp["w3"], kp["b3"], kp["w4"], kp["b4"])

    try:
        x_recon_p, ml_p = run(single_buffer_weights=True)
    except Exception:
        # Fallback for jax versions without single-buffer pipeline_mode.
        x_recon_p, ml_p = run(single_buffer_weights=False)

    x_recon = x_recon_p[:batch, :input_dim]
    mean = ml_p[:batch, :latent_dim]
    logvar = ml_p[:batch, lat_p:lat_p + latent_dim]
    return x_recon, mean, logvar


# ----------------------------------------------------------------------------
# Init + pure-JAX reference (same bf16-matmul / f32-accumulate precision)
# ----------------------------------------------------------------------------
def init_params(key, input_dim, hidden_dim, latent_dim):
    ks = jax.random.split(key, 10)

    def lin(kw, kb, fan_in, fan_out):
        bound = 1.0 / jnp.sqrt(jnp.float32(fan_in))
        w = jax.random.uniform(kw, (fan_in, fan_out), jnp.float32, -bound, bound)
        b = jax.random.uniform(kb, (1, fan_out), jnp.float32, -bound, bound)
        return w, b

    w1, b1 = lin(ks[0], ks[1], input_dim, hidden_dim)
    wm, bm = lin(ks[2], ks[3], hidden_dim, latent_dim)
    wv, bv = lin(ks[4], ks[5], hidden_dim, latent_dim)
    w3, b3 = lin(ks[6], ks[7], latent_dim, hidden_dim)
    w4, b4 = lin(ks[8], ks[9], hidden_dim, input_dim)
    return dict(w1=w1, b1=b1, wm=wm, bm=bm, wv=wv, bv=bv,
                w3=w3, b3=b3, w4=w4, b4=b4)


def vae_reference(x, eps, p):
    bf = jnp.bfloat16

    def mm(a, w):
        return jnp.dot(a.astype(bf), w.astype(bf),
                       preferred_element_type=jnp.float32)

    h = jax.nn.relu(mm(x, p["w1"]) + p["b1"])
    mean = mm(h, p["wm"]) + p["bm"]
    logvar = mm(h, p["wv"]) + p["bv"]
    z = mean + eps * jnp.exp(0.5 * logvar)
    h2 = jax.nn.relu(mm(z, p["w3"]) + p["b3"])
    x_recon = jax.nn.sigmoid(mm(h2, p["w4"]) + p["b4"])
    return x_recon, mean, logvar


if __name__ == "__main__":
    batch, input_dim, hidden_dim, latent_dim = 16, 64, 32, 16

    key = jax.random.PRNGKey(0)
    k_x, k_eps, k_p = jax.random.split(key, 3)

    x = jax.random.normal(k_x, (batch, input_dim), jnp.float32)
    # torch.randn_like reparam noise is taken as an explicit input for
    # determinism (same semantics: z = mean + eps * std).
    eps = jax.random.normal(k_eps, (batch, latent_dim), jnp.float32)

    params = init_params(k_p, input_dim, hidden_dim, latent_dim)
    kparams = pack_params(params, input_dim, hidden_dim, latent_dim)

    # Auto tile selection: batch=16 -> one full (16, 128) bf16 tile, grid=(1,).
    x_recon, mean, logvar = vae_forward(x, eps, kparams)
    jax.block_until_ready((x_recon, mean, logvar))

    xr_ref, m_ref, lv_ref = vae_reference(x, eps, params)
    assert x_recon.shape == (batch, input_dim)
    assert mean.shape == (batch, latent_dim)
    assert logvar.shape == (batch, latent_dim)
    assert jnp.allclose(x_recon, xr_ref, atol=2e-3, rtol=2e-3)
    assert jnp.allclose(mean, m_ref, atol=2e-3, rtol=2e-3)
    assert jnp.allclose(logvar, lv_ref, atol=2e-3, rtol=2e-3)

    print("KERNEL_OK")
</pallas_src>

<mosaic_0001>
module attributes {stable_mosaic.version = 11 : i64} {
  func.func @_vae_kernel(%arg0: i32, %arg1: memref<16x128xbf16, #tpu.memory_space<vmem>>, %arg2: memref<16x128xf32, #tpu.memory_space<vmem>>, %arg3: memref<128x128xbf16, #tpu.memory_space<vmem>>, %arg4: memref<1x128xf32, #tpu.memory_space<vmem>>, %arg5: memref<128x256xbf16, #tpu.memory_space<vmem>>, %arg6: memref<1x256xf32, #tpu.memory_space<vmem>>, %arg7: memref<128x128xbf16, #tpu.memory_space<vmem>>, %arg8: memref<1x128xf32, #tpu.memory_space<vmem>>, %arg9: memref<128x128xbf16, #tpu.memory_space<vmem>>, %arg10: memref<1x128xf32, #tpu.memory_space<vmem>>, %arg11: memref<16x128xf32, #tpu.memory_space<vmem>>, %arg12: memref<16x256xf32, #tpu.memory_space<vmem>>) attributes {dimension_semantics = [#tpu.dimension_semantics<parallel>], iteration_bounds = array<i64: 1>, scalar_prefetch = 0 : i64, scratch_operands = 0 : i64, tpu.core_type = #tpu.core_type<tc>, window_params = [{transform_indices = @transform_0, window_bounds = array<i64: 16, 128>}, {transform_indices = @transform_1, window_bounds = array<i64: 16, 128>}, {pipeline_mode = #tpu.pipeline_mode<synchronous>, transform_indices = @transform_2, window_bounds = array<i64: 128, 128>}, {pipeline_mode = #tpu.pipeline_mode<synchronous>, transform_indices = @transform_3, window_bounds = array<i64: 1, 128>}, {pipeline_mode = #tpu.pipeline_mode<synchronous>, transform_indices = @transform_4, window_bounds = array<i64: 128, 256>}, {pipeline_mode = #tpu.pipeline_mode<synchronous>, transform_indices = @transform_5, window_bounds = array<i64: 1, 256>}, {pipeline_mode = #tpu.pipeline_mode<synchronous>, transform_indices = @transform_6, window_bounds = array<i64: 128, 128>}, {pipeline_mode = #tpu.pipeline_mode<synchronous>, transform_indices = @transform_7, window_bounds = array<i64: 1, 128>}, {pipeline_mode = #tpu.pipeline_mode<synchronous>, transform_indices = @transform_8, window_bounds = array<i64: 128, 128>}, {pipeline_mode = #tpu.pipeline_mode<synchronous>, transform_indices = @transform_9, window_bounds = array<i64: 1, 128>}, {transform_indices = @transform_10, window_bounds = array<i64: 16, 128>}, {transform_indices = @transform_11, window_bounds = array<i64: 16, 256>}]} {
    %c0 = arith.constant 0 : index
    %c0_0 = arith.constant 0 : index
    %0 = vector.load %arg1[%c0, %c0_0] : memref<16x128xbf16, #tpu.memory_space<vmem>>, vector<16x128xbf16>
    %c0_1 = arith.constant 0 : index
    %c0_2 = arith.constant 0 : index
    %1 = vector.load %arg3[%c0_1, %c0_2] : memref<128x128xbf16, #tpu.memory_space<vmem>>, vector<128x128xbf16>
    %cst = arith.constant dense<0.000000e+00> : vector<16x128xf32>
    %2 = tpu.matmul %0, %1, %cst {dimension_numbers = #tpu.dot_dimension_numbers<[1], [0], [0], [1], [0, 0, 1, 1], [], []>} : vector<16x128xbf16>, vector<128x128xbf16>, vector<16x128xf32> -> vector<16x128xf32>
    %c0_3 = arith.constant 0 : index
    %c0_4 = arith.constant 0 : index
    %3 = vector.load %arg4[%c0_3, %c0_4] : memref<1x128xf32, #tpu.memory_space<vmem>>, vector<1x128xf32>
    %4 = vector.broadcast %3 : vector<1x128xf32> to vector<16x128xf32>
    %5 = arith.addf %2, %4 : vector<16x128xf32>
    %cst_5 = arith.constant 0.000000e+00 : f32
    %6 = vector.broadcast %cst_5 : f32 to vector<16x128xf32>
    %7 = arith.maximumf %5, %6 : vector<16x128xf32>
    %8 = arith.truncf %7 : vector<16x128xf32> to vector<16x128xbf16>
    %c0_6 = arith.constant 0 : index
    %c0_7 = arith.constant 0 : index
    %9 = vector.load %arg5[%c0_6, %c0_7] : memref<128x256xbf16, #tpu.memory_space<vmem>>, vector<128x256xbf16>
    %cst_8 = arith.constant dense<0.000000e+00> : vector<16x256xf32>
    %10 = tpu.matmul %8, %9, %cst_8 {dimension_numbers = #tpu.dot_dimension_numbers<[1], [0], [0], [1], [0, 0, 1, 1], [], []>} : vector<16x128xbf16>, vector<128x256xbf16>, vector<16x256xf32> -> vector<16x256xf32>
    %c0_9 = arith.constant 0 : index
    %c0_10 = arith.constant 0 : index
    %11 = vector.load %arg6[%c0_9, %c0_10] : memref<1x256xf32, #tpu.memory_space<vmem>>, vector<1x256xf32>
    %12 = vector.broadcast %11 : vector<1x256xf32> to vector<16x256xf32>
    %13 = arith.addf %10, %12 : vector<16x256xf32>
    %14 = vector.extract_strided_slice %13 {offsets = [0, 0], sizes = [16, 128], strides = [1, 1]} : vector<16x256xf32> to vector<16x128xf32>
    %15 = vector.extract_strided_slice %13 {offsets = [0, 128], sizes = [16, 128], strides = [1, 1]} : vector<16x256xf32> to vector<16x128xf32>
    %c0_11 = arith.constant 0 : index
    %c0_12 = arith.constant 0 : index
    %16 = vector.load %arg2[%c0_11, %c0_12] : memref<16x128xf32, #tpu.memory_space<vmem>>, vector<16x128xf32>
    %cst_13 = arith.constant 5.000000e-01 : f32
    %17 = vector.broadcast %cst_13 : f32 to vector<16x128xf32>
    %18 = arith.mulf %17, %15 : vector<16x128xf32>
    %19 = math.exp %18 : vector<16x128xf32>
    %20 = arith.mulf %16, %19 : vector<16x128xf32>
    %21 = arith.addf %14, %20 : vector<16x128xf32>
    %22 = arith.truncf %21 : vector<16x128xf32> to vector<16x128xbf16>
    %c0_14 = arith.constant 0 : index
    %c0_15 = arith.constant 0 : index
    %23 = vector.load %arg7[%c0_14, %c0_15] : memref<128x128xbf16, #tpu.memory_space<vmem>>, vector<128x128xbf16>
    %cst_16 = arith.constant dense<0.000000e+00> : vector<16x128xf32>
    %24 = tpu.matmul %22, %23, %cst_16 {dimension_numbers = #tpu.dot_dimension_numbers<[1], [0], [0], [1], [0, 0, 1, 1], [], []>} : vector<16x128xbf16>, vector<128x128xbf16>, vector<16x128xf32> -> vector<16x128xf32>
    %c0_17 = arith.constant 0 : index
    %c0_18 = arith.constant 0 : index
    %25 = vector.load %arg8[%c0_17, %c0_18] : memref<1x128xf32, #tpu.memory_space<vmem>>, vector<1x128xf32>
    %26 = vector.broadcast %25 : vector<1x128xf32> to vector<16x128xf32>
    %27 = arith.addf %24, %26 : vector<16x128xf32>
    %cst_19 = arith.constant 0.000000e+00 : f32
    %28 = vector.broadcast %cst_19 : f32 to vector<16x128xf32>
    %29 = arith.maximumf %27, %28 : vector<16x128xf32>
    %30 = arith.truncf %29 : vector<16x128xf32> to vector<16x128xbf16>
    %c0_20 = arith.constant 0 : index
    %c0_21 = arith.constant 0 : index
    %31 = vector.load %arg9[%c0_20, %c0_21] : memref<128x128xbf16, #tpu.memory_space<vmem>>, vector<128x128xbf16>
    %cst_22 = arith.constant dense<0.000000e+00> : vector<16x128xf32>
    %32 = tpu.matmul %30, %31, %cst_22 {dimension_numbers = #tpu.dot_dimension_numbers<[1], [0], [0], [1], [0, 0, 1, 1], [], []>} : vector<16x128xbf16>, vector<128x128xbf16>, vector<16x128xf32> -> vector<16x128xf32>
    %c0_23 = arith.constant 0 : index
    %c0_24 = arith.constant 0 : index
    %33 = vector.load %arg10[%c0_23, %c0_24] : memref<1x128xf32, #tpu.memory_space<vmem>>, vector<1x128xf32>
    %34 = vector.broadcast %33 : vector<1x128xf32> to vector<16x128xf32>
    %35 = arith.addf %32, %34 : vector<16x128xf32>
    %36 = arith.negf %35 : vector<16x128xf32>
    %37 = math.exp %36 : vector<16x128xf32>
    %cst_25 = arith.constant 1.000000e+00 : f32
    %38 = vector.broadcast %cst_25 : f32 to vector<16x128xf32>
    %39 = arith.addf %38, %37 : vector<16x128xf32>
    %40 = arith.divf %38, %39 : vector<16x128xf32>
    %c0_26 = arith.constant 0 : index
    %c0_27 = arith.constant 0 : index
    %41 = vector.load %arg11[%c0_26, %c0_27] : memref<16x128xf32, #tpu.memory_space<vmem>>, vector<16x128xf32>
    tpu.vector_store %arg11[%c0_26, %c0_27], %40 {strides = array<i32>} : memref<16x128xf32, #tpu.memory_space<vmem>>, vector<16x128xf32>,
    %c0_28 = arith.constant 0 : index
    %c0_29 = arith.constant 0 : index
    %42 = vector.load %arg12[%c0_28, %c0_29] : memref<16x256xf32, #tpu.memory_space<vmem>>, vector<16x256xf32>
    tpu.vector_store %arg12[%c0_28, %c0_29], %13 {strides = array<i32>} : memref<16x256xf32, #tpu.memory_space<vmem>>, vector<16x256xf32>,
    return
  }
  func.func @transform_0(%arg0: i32) -> (i32, i32) {
    %c0_i32 = arith.constant 0 : i32
    %c0_i32_0 = arith.constant 0 : i32
    return %arg0, %c0_i32 : i32, i32
  }
  func.func @transform_1(%arg0: i32) -> (i32, i32) {
    %c0_i32 = arith.constant 0 : i32
    %c0_i32_0 = arith.constant 0 : i32
    return %arg0, %c0_i32 : i32, i32
  }
  func.func @transform_2(%arg0: i32) -> (i32, i32) {
    %c0_i32 = arith.constant 0 : i32
    %c0_i32_0 = arith.constant 0 : i32
    %c0_i32_1 = arith.constant 0 : i32
    return %c0_i32, %c0_i32_0 : i32, i32
  }
  func.func @transform_3(%arg0: i32) -> (i32, i32) {
    %c0_i32 = arith.constant 0 : i32
    %c0_i32_0 = arith.constant 0 : i32
    %c0_i32_1 = arith.constant 0 : i32
    return %c0_i32, %c0_i32_0 : i32, i32
  }
  func.func @transform_4(%arg0: i32) -> (i32, i32) {
    %c0_i32 = arith.constant 0 : i32
    %c0_i32_0 = arith.constant 0 : i32
    %c0_i32_1 = arith.constant 0 : i32
    return %c0_i32, %c0_i32_0 : i32, i32
  }
  func.func @transform_5(%arg0: i32) -> (i32, i32) {
    %c0_i32 = arith.constant 0 : i32
    %c0_i32_0 = arith.constant 0 : i32
    %c0_i32_1 = arith.constant 0 : i32
    return %c0_i32, %c0_i32_0 : i32, i32
  }
  func.func @transform_6(%arg0: i32) -> (i32, i32) {
    %c0_i32 = arith.constant 0 : i32
    %c0_i32_0 = arith.constant 0 : i32
    %c0_i32_1 = arith.constant 0 : i32
    return %c0_i32, %c0_i32_0 : i32, i32
  }
  func.func @transform_7(%arg0: i32) -> (i32, i32) {
    %c0_i32 = arith.constant 0 : i32
    %c0_i32_0 = arith.constant 0 : i32
    %c0_i32_1 = arith.constant 0 : i32
    return %c0_i32, %c0_i32_0 : i32, i32
  }
  func.func @transform_8(%arg0: i32) -> (i32, i32) {
    %c0_i32 = arith.constant 0 : i32
    %c0_i32_0 = arith.constant 0 : i32
    %c0_i32_1 = arith.constant 0 : i32
    return %c0_i32, %c0_i32_0 : i32, i32
  }
  func.func @transform_9(%arg0: i32) -> (i32, i32) {
    %c0_i32 = arith.constant 0 : i32
    %c0_i32_0 = arith.constant 0 : i32
    %c0_i32_1 = arith.constant 0 : i32
    return %c0_i32, %c0_i32_0 : i32, i32
  }
  func.func @transform_10(%arg0: i32) -> (i32, i32) {
    %c0_i32 = arith.constant 0 : i32
    %c0_i32_0 = arith.constant 0 : i32
    return %arg0, %c0_i32 : i32, i32
  }
  func.func @transform_11(%arg0: i32) -> (i32, i32) {
    %c0_i32 = arith.constant 0 : i32
    %c0_i32_0 = arith.constant 0 : i32
    return %arg0, %c0_i32 : i32, i32
  }
}

module attributes {stable_mosaic.version = 11 : i64} {
  func.func @_vae_kernel(%arg0: i32, %arg1: memref<16x128xbf16, #tpu.memory_space<vmem>>, %arg2: memref<16x128xf32, #tpu.memory_space<vmem>>, %arg3: memref<128x128xbf16, #tpu.memory_space<vmem>>, %arg4: memref<1x128xf32, #tpu.memory_space<vmem>>, %arg5: memref<128x256xbf16, #tpu.memory_space<vmem>>, %arg6: memref<1x256xf32, #tpu.memory_space<vmem>>, %arg7: memref<128x128xbf16, #tpu.memory_space<vmem>>, %arg8: memref<1x128xf32, #tpu.memory_space<vmem>>, %arg9: memref<128x128xbf16, #tpu.memory_space<vmem>>, %arg10: memref<1x128xf32, #tpu.memory_space<vmem>>, %arg11: memref<16x128xf32, #tpu.memory_space<vmem>>, %arg12: memref<16x256xf32, #tpu.memory_space<vmem>>) attributes {dimension_semantics = [#tpu.dimension_semantics<parallel>], iteration_bounds = array<i64: 1>, scalar_prefetch = 0 : i64, scratch_operands = 0 : i64, tpu.core_type = #tpu.core_type<tc>, window_params = [{transform_indices = @transform_0, window_bounds = array<i64: 16, 128>}, {transform_indices = @transform_1, window_bounds = array<i64: 16, 128>}, {pipeline_mode = #tpu.pipeline_mode<synchronous>, transform_indices = @transform_2, window_bounds = array<i64: 128, 128>}, {pipeline_mode = #tpu.pipeline_mode<synchronous>, transform_indices = @transform_3, window_bounds = array<i64: 1, 128>}, {pipeline_mode = #tpu.pipeline_mode<synchronous>, transform_indices = @transform_4, window_bounds = array<i64: 128, 256>}, {pipeline_mode = #tpu.pipeline_mode<synchronous>, transform_indices = @transform_5, window_bounds = array<i64: 1, 256>}, {pipeline_mode = #tpu.pipeline_mode<synchronous>, transform_indices = @transform_6, window_bounds = array<i64: 128, 128>}, {pipeline_mode = #tpu.pipeline_mode<synchronous>, transform_indices = @transform_7, window_bounds = array<i64: 1, 128>}, {pipeline_mode = #tpu.pipeline_mode<synchronous>, transform_indices = @transform_8, window_bounds = array<i64: 128, 128>}, {pipeline_mode = #tpu.pipeline_mode<synchronous>, transform_indices = @transform_9, window_bounds = array<i64: 1, 128>}, {transform_indices = @transform_10, window_bounds = array<i64: 16, 128>}, {transform_indices = @transform_11, window_bounds = array<i64: 16, 256>}]} {
    %c0 = arith.constant 0 : index
    %c0_0 = arith.constant 0 : index
    %0 = vector.load %arg1[%c0, %c0_0] : memref<16x128xbf16, #tpu.memory_space<vmem>>, vector<16x128xbf16>
    %c0_1 = arith.constant 0 : index
    %c0_2 = arith.constant 0 : index
    %1 = vector.load %arg3[%c0_1, %c0_2] : memref<128x128xbf16, #tpu.memory_space<vmem>>, vector<128x128xbf16>
    %cst = arith.constant dense<0.000000e+00> : vector<16x128xf32>
    %2 = tpu.matmul %0, %1, %cst {dimension_numbers = #tpu.dot_dimension_numbers<[1], [0], [0], [1], [0, 0, 1, 1], [], []>} : vector<16x128xbf16>, vector<128x128xbf16>, vector<16x128xf32> -> vector<16x128xf32>
    %c0_3 = arith.constant 0 : index
    %c0_4 = arith.constant 0 : index
    %3 = vector.load %arg4[%c0_3, %c0_4] : memref<1x128xf32, #tpu.memory_space<vmem>>, vector<1x128xf32>
    %4 = vector.broadcast %3 : vector<1x128xf32> to vector<16x128xf32>
    %5 = arith.addf %2, %4 : vector<16x128xf32>
    %cst_5 = arith.constant 0.000000e+00 : f32
    %6 = vector.broadcast %cst_5 : f32 to vector<16x128xf32>
    %7 = arith.maximumf %5, %6 : vector<16x128xf32>
    %8 = arith.truncf %7 : vector<16x128xf32> to vector<16x128xbf16>
    %c0_6 = arith.constant 0 : index
    %c0_7 = arith.constant 0 : index
    %9 = vector.load %arg5[%c0_6, %c0_7] : memref<128x256xbf16, #tpu.memory_space<vmem>>, vector<128x256xbf16>
    %cst_8 = arith.constant dense<0.000000e+00> : vector<16x256xf32>
    %10 = tpu.matmul %8, %9, %cst_8 {dimension_numbers = #tpu.dot_dimension_numbers<[1], [0], [0], [1], [0, 0, 1, 1], [], []>} : vector<16x128xbf16>, vector<128x256xbf16>, vector<16x256xf32> -> vector<16x256xf32>
    %c0_9 = arith.constant 0 : index
    %c0_10 = arith.constant 0 : index
    %11 = vector.load %arg6[%c0_9, %c0_10] : memref<1x256xf32, #tpu.memory_space<vmem>>, vector<1x256xf32>
    %12 = vector.broadcast %11 : vector<1x256xf32> to vector<16x256xf32>
    %13 = arith.addf %10, %12 : vector<16x256xf32>
    %14 = vector.extract_strided_slice %13 {offsets = [0, 0], sizes = [16, 128], strides = [1, 1]} : vector<16x256xf32> to vector<16x128xf32>
    %15 = vector.extract_strided_slice %13 {offsets = [0, 128], sizes = [16, 128], strides = [1, 1]} : vector<16x256xf32> to vector<16x128xf32>
    %c0_11 = arith.constant 0 : index
    %c0_12 = arith.constant 0 : index
    %16 = vector.load %arg2[%c0_11, %c0_12] : memref<16x128xf32, #tpu.memory_space<vmem>>, vector<16x128xf32>
    %cst_13 = arith.constant 5.000000e-01 : f32
    %17 = vector.broadcast %cst_13 : f32 to vector<16x128xf32>
    %18 = arith.mulf %17, %15 : vector<16x128xf32>
    %19 = math.exp %18 : vector<16x128xf32>
    %20 = arith.mulf %16, %19 : vector<16x128xf32>
    %21 = arith.addf %14, %20 : vector<16x128xf32>
    %22 = arith.truncf %21 : vector<16x128xf32> to vector<16x128xbf16>
    %c0_14 = arith.constant 0 : index
    %c0_15 = arith.constant 0 : index
    %23 = vector.load %arg7[%c0_14, %c0_15] : memref<128x128xbf16, #tpu.memory_space<vmem>>, vector<128x128xbf16>
    %cst_16 = arith.constant dense<0.000000e+00> : vector<16x128xf32>
    %24 = tpu.matmul %22, %23, %cst_16 {dimension_numbers = #tpu.dot_dimension_numbers<[1], [0], [0], [1], [0, 0, 1, 1], [], []>} : vector<16x128xbf16>, vector<128x128xbf16>, vector<16x128xf32> -> vector<16x128xf32>
    %c0_17 = arith.constant 0 : index
    %c0_18 = arith.constant 0 : index
    %25 = vector.load %arg8[%c0_17, %c0_18] : memref<1x128xf32, #tpu.memory_space<vmem>>, vector<1x128xf32>
    %26 = vector.broadcast %25 : vector<1x128xf32> to vector<16x128xf32>
    %27 = arith.addf %24, %26 : vector<16x128xf32>
    %cst_19 = arith.constant 0.000000e+00 : f32
    %28 = vector.broadcast %cst_19 : f32 to vector<16x128xf32>
    %29 = arith.maximumf %27, %28 : vector<16x128xf32>
    %30 = arith.truncf %29 : vector<16x128xf32> to vector<16x128xbf16>
    %c0_20 = arith.constant 0 : index
    %c0_21 = arith.constant 0 : index
    %31 = vector.load %arg9[%c0_20, %c0_21] : memref<128x128xbf16, #tpu.memory_space<vmem>>, vector<128x128xbf16>
    %cst_22 = arith.constant dense<0.000000e+00> : vector<16x128xf32>
    %32 = tpu.matmul %30, %31, %cst_22 {dimension_numbers = #tpu.dot_dimension_numbers<[1], [0], [0], [1], [0, 0, 1, 1], [], []>} : vector<16x128xbf16>, vector<128x128xbf16>, vector<16x128xf32> -> vector<16x128xf32>
    %c0_23 = arith.constant 0 : index
    %c0_24 = arith.constant 0 : index
    %33 = vector.load %arg10[%c0_23, %c0_24] : memref<1x128xf32, #tpu.memory_space<vmem>>, vector<1x128xf32>
    %34 = vector.broadcast %33 : vector<1x128xf32> to vector<16x128xf32>
    %35 = arith.addf %32, %34 : vector<16x128xf32>
    %36 = arith.negf %35 : vector<16x128xf32>
    %37 = math.exp %36 : vector<16x128xf32>
    %cst_25 = arith.constant 1.000000e+00 : f32
    %38 = vector.broadcast %cst_25 : f32 to vector<16x128xf32>
    %39 = arith.addf %38, %37 : vector<16x128xf32>
    %40 = arith.divf %38, %39 : vector<16x128xf32>
    %c0_26 = arith.constant 0 : index
    %c0_27 = arith.constant 0 : index
    %41 = vector.load %arg11[%c0_26, %c0_27] : memref<16x128xf32, #tpu.memory_space<vmem>>, vector<16x128xf32>
    tpu.vector_store %arg11[%c0_26, %c0_27], %40 {strides = array<i32>} : memref<16x128xf32, #tpu.memory_space<vmem>>, vector<16x128xf32>,
    %c0_28 = arith.constant 0 : index
    %c0_29 = arith.constant 0 : index
    %42 = vector.load %arg12[%c0_28, %c0_29] : memref<16x256xf32, #tpu.memory_space<vmem>>, vector<16x256xf32>
    tpu.vector_store %arg12[%c0_28, %c0_29], %13 {strides = array<i32>} : memref<16x256xf32, #tpu.memory_space<vmem>>, vector<16x256xf32>,
    return
  }
  func.func @transform_0(%arg0: i32) -> (i32, i32) {
    %c0_i32 = arith.constant 0 : i32
    %c0_i32_0 = arith.constant 0 : i32
    return %arg0, %c0_i32 : i32, i32
  }
  func.func @transform_1(%arg0: i32) -> (i32, i32) {
    %c0_i32 = arith.constant 0 : i32
    %c0_i32_0 = arith.constant 0 : i32
    return %arg0, %c0_i32 : i32, i32
  }
  func.func @transform_2(%arg0: i32) -> (i32, i32) {
    %c0_i32 = arith.constant 0 : i32
    %c0_i32_0 = arith.constant 0 : i32
    %c0_i32_1 = arith.constant 0 : i32
    return %c0_i32, %c0_i32_0 : i32, i32
  }
  func.func @transform_3(%arg0: i32) -> (i32, i32) {
    %c0_i32 = arith.constant 0 : i32
    %c0_i32_0 = arith.constant 0 : i32
    %c0_i32_1 = arith.constant 0 : i32
    return %c0_i32, %c0_i32_0 : i32, i32
  }
  func.func @transform_4(%arg0: i32) -> (i32, i32) {
    %c0_i32 = arith.constant 0 : i32
    %c0_i32_0 = arith.constant 0 : i32
    %c0_i32_1 = arith.constant 0 : i32
    return %c0_i32, %c0_i32_0 : i32, i32
  }
  func.func @transform_5(%arg0: i32) -> (i32, i32) {
    %c0_i32 = arith.constant 0 : i32
    %c0_i32_0 = arith.constant 0 : i32
    %c0_i32_1 = arith.constant 0 : i32
    return %c0_i32, %c0_i32_0 : i32, i32
  }
  func.func @transform_6(%arg0: i32) -> (i32, i32) {
    %c0_i32 = arith.constant 0 : i32
    %c0_i32_0 = arith.constant 0 : i32
    %c0_i32_1 = arith.constant 0 : i32
    return %c0_i32, %c0_i32_0 : i32, i32
  }
  func.func @transform_7(%arg0: i32) -> (i32, i32) {
    %c0_i32 = arith.constant 0 : i32
    %c0_i32_0 = arith.constant 0 : i32
    %c0_i32_1 = arith.constant 0 : i32
    return %c0_i32, %c0_i32_0 : i32, i32
  }
  func.func @transform_8(%arg0: i32) -> (i32, i32) {
    %c0_i32 = arith.constant 0 : i32
    %c0_i32_0 = arith.constant 0 : i32
    %c0_i32_1 = arith.constant 0 : i32
    return %c0_i32, %c0_i32_0 : i32, i32
  }
  func.func @transform_9(%arg0: i32) -> (i32, i32) {
    %c0_i32 = arith.constant 0 : i32
    %c0_i32_0 = arith.constant 0 : i32
    %c0_i32_1 = arith.constant 0 : i32
    return %c0_i32, %c0_i32_0 : i32, i32
  }
  func.func @transform_10(%arg0: i32) -> (i32, i32) {
    %c0_i32 = arith.constant 0 : i32
    %c0_i32_0 = arith.constant 0 : i32
    return %arg0, %c0_i32 : i32, i32
  }
  func.func @transform_11(%arg0: i32) -> (i32, i32) {
    %c0_i32 = arith.constant 0 : i32
    %c0_i32_0 = arith.constant 0 : i32
    return %arg0, %c0_i32 : i32, i32
  }
}

</mosaic_0001>

<llo_original>
// kernel: tpu_custom_call.1
$region0: #{tpu_custom_call.1}
  #allocation0 [shape = 'u32[]', space=smem, size = 0x4, offset = 0x4, fixed_abs, tag = 'smem constant byte address 0x4 - core index']
  #allocation1 [shape = 'u32[144,128]{1,0:T(1,128)}', space=vmem, size = 0x12000, scoped, tag = 'internal scratch']
  %s0 = inlined_call_operand.hbm [shape: bf16[16,128], index: 0, kind: input, shape index: {}]
  %s1 = inlined_call_operand.hbm [shape: f32[16,128], index: 1, kind: input, shape index: {}]
  %s2 = inlined_call_operand.hbm [shape: bf16[128,128], index: 2, kind: input, shape index: {}]
  %s3 = inlined_call_operand.vmem [shape: f32[1,128], index: 3, kind: input, shape index: {}]
  %s4 = inlined_call_operand.hbm [shape: bf16[128,256], index: 4, kind: input, shape index: {}]
  %s5 = inlined_call_operand.vmem [shape: f32[1,256], index: 5, kind: input, shape index: {}]
  %s6 = inlined_call_operand.hbm [shape: bf16[128,128], index: 6, kind: input, shape index: {}]
  %s7 = inlined_call_operand.vmem [shape: f32[1,128], index: 7, kind: input, shape index: {}]
  %s8 = inlined_call_operand.hbm [shape: bf16[128,128], index: 8, kind: input, shape index: {}]
  %s9 = inlined_call_operand.vmem [shape: f32[1,128], index: 9, kind: input, shape index: {}]
  %s10 = inlined_call_operand.hbm [shape: f32[16,128], index: 10, kind: output, shape index: {0}]
  %s11 = inlined_call_operand.hbm [shape: f32[16,256], index: 11, kind: output, shape index: {1}]
  %12 = xla_tuple %s10, %s11
  %s13 = sld [smem:[#allocation0]]
  $region82: #{tpu_custom_call.1} parent=0
    _
  %s15 = ssub.s32 1, %s13
  %s16 = scalar_select 0, %s15, %s13
  $region1: #{tpu_custom_call.1} parent=0
    #allocation2 [shape = 'u8[4096]{0}', space=vmem, size = 0x1000, scoped, tag = 'input window, operand 0, single buffered']
    #allocation3 [shape = 's32[1]{0}', space=sflag, size = 0x4, scoped, tag = 'scoped memory for tpu_custom_call.1']
    #allocation4 [shape = 's32[1]{0}', space=sflag, size = 0x4, scoped, tag = 'scoped memory for tpu_custom_call.1']
    #allocation5 [shape = 'u8[8192]{0}', space=vmem, size = 0x2000, scoped, tag = 'input window, operand 1, single buffered']
    #allocation6 [shape = 's32[1]{0}', space=sflag, size = 0x4, scoped, tag = 'scoped memory for tpu_custom_call.1']
    #allocation7 [shape = 'u8[32768]{0}', space=vmem, size = 0x8000, scoped, tag = 'input window, operand 2, single buffered']
    #allocation8 [shape = 'u8[65536]{0}', space=vmem, size = 0x10000, scoped, tag = 'input window, operand 4, single buffered']
    #allocation9 [shape = 's32[1]{0}', space=sflag, size = 0x4, scoped, tag = 'scoped memory for tpu_custom_call.1']
    #allocation10 [shape = 'u8[32768]{0}', space=vmem, size = 0x8000, scoped, tag = 'input window, operand 6, single buffered']
    #allocation11 [shape = 'u8[32768]{0}', space=vmem, size = 0x8000, scoped, tag = 'input window, operand 8, single buffered']
    #allocation12 [shape = 's32[1]{0}', space=sflag, size = 0x4, scoped, tag = 'scoped memory for tpu_custom_call.1']
    #allocation13 [shape = 'u8[8192]{0}', space=vmem, size = 0x2000, scoped, tag = 'output window, operand 0, single buffered']
    #allocation14 [shape = 'u8[16384]{0}', space=vmem, size = 0x4000, scoped, tag = 'output window, operand 1, single buffered']
    #allocation15 [shape = 's32[1]{0}', space=sflag, size = 0x4, scoped, tag = 'scoped memory for tpu_custom_call.1']
    %17 = vsyncpa [#allocation3], 0
    %18 = vsyncpa [#allocation6], 0
    %19 = vsyncpa [#allocation9], 0
    %20 = vsyncpa [#allocation12], 0
    %21 = vsyncpa [#allocation4], 0
    %22 = vsyncpa [#allocation15], 0
    // Predicated region
    $region2: #{tpu_custom_call.1} parent=1 // pred_check
      _
    $region3: #{tpu_custom_call.1} parent=1 // pred_check_branch
      %24 = sbr.rel (0) target = $region5
    $region4: #{tpu_custom_call.1} parent=1 // pred_region
      %s26 = ssub.s32 128, 128
      %27 = vsyncadd [#allocation3], %s26
      %s28 = sshll.u32 [#allocation2], 4
      %s29 = int_to_ptr.vmem [resolvable:$true] %s28
      %34 = dma.hbm_to_vmem [thread:$0]  %s0, 128, %s29, [#allocation3], 64, 64, 4
    $region5: #{tpu_custom_call.1} parent=1 // pred_fallthru
      _
    // Predicated region
    $region6: #{tpu_custom_call.1} parent=1 // pred_check
      _
    $region7: #{tpu_custom_call.1} parent=1 // pred_check_branch
      %36 = sbr.rel (0) target = $region9
    $region8: #{tpu_custom_call.1} parent=1 // pred_region
      %s38 = ssub.s32 256, 256
      %39 = vsyncadd [#allocation6], %s38
      %s40 = sshll.u32 [#allocation5], 4
      %s41 = int_to_ptr.vmem [resolvable:$true] %s40
      %46 = dma.hbm_to_vmem [thread:$0]  %s1, 256, %s41, [#allocation6], 128, 128, 8
    $region9: #{tpu_custom_call.1} parent=1 // pred_fallthru
      _
    // Predicated region
    $region10: #{tpu_custom_call.1} parent=1 // pred_check
      _
    $region11: #{tpu_custom_call.1} parent=1 // pred_check_branch
      %48 = sbr.rel (0) target = $region13
    $region12: #{tpu_custom_call.1} parent=1 // pred_region
      %s50 = ssub.s32 1024, 1024
      %51 = vsyncadd [#allocation6], %s50
      %s52 = sshll.u32 [#allocation7], 4
      %s53 = int_to_ptr.vmem [resolvable:$true] %s52
      %58 = dma.hbm_to_vmem [thread:$0]  %s2, 1024, %s53, [#allocation6], 64, 64, 4
    $region13: #{tpu_custom_call.1} parent=1 // pred_fallthru
      _
    // Predicated region
    $region14: #{tpu_custom_call.1} parent=1 // pred_check
      _
    $region15: #{tpu_custom_call.1} parent=1 // pred_check_branch
      %60 = sbr.rel (0) target = $region17
    $region16: #{tpu_custom_call.1} parent=1 // pred_region
      _
    $region17: #{tpu_custom_call.1} parent=1 // pred_fallthru
      _
    // Predicated region
    $region18: #{tpu_custom_call.1} parent=1 // pred_check
      _
    $region19: #{tpu_custom_call.1} parent=1 // pred_check_branch
      %62 = sbr.rel (0) target = $region21
    $region20: #{tpu_custom_call.1} parent=1 // pred_region
      %s64 = ssub.s32 2048, 2048
      %65 = vsyncadd [#allocation9], %s64
      %s66 = sshll.u32 [#allocation8], 4
      %s67 = int_to_ptr.vmem [resolvable:$true] %s66
      %72 = dma.hbm_to_vmem [thread:$0]  %s4, 2048, %s67, [#allocation9], 128, 128, 8
    $region21: #{tpu_custom_call.1} parent=1 // pred_fallthru
      _
    // Predicated region
    $region22: #{tpu_custom_call.1} parent=1 // pred_check
      _
    $region23: #{tpu_custom_call.1} parent=1 // pred_check_branch
      %74 = sbr.rel (0) target = $region25
    $region24: #{tpu_custom_call.1} parent=1 // pred_region
      _
    $region25: #{tpu_custom_call.1} parent=1 // pred_fallthru
      _
    // Predicated region
    $region26: #{tpu_custom_call.1} parent=1 // pred_check
      _
    $region27: #{tpu_custom_call.1} parent=1 // pred_check_branch
      %76 = sbr.rel (0) target = $region29
    $region28: #{tpu_custom_call.1} parent=1 // pred_region
      %s78 = ssub.s32 1024, 1024
      %79 = vsyncadd [#allocation9], %s78
      %s80 = sshll.u32 [#allocation10], 4
      %s81 = int_to_ptr.vmem [resolvable:$true] %s80
      %86 = dma.hbm_to_vmem [thread:$0]  %s6, 1024, %s81, [#allocation9], 64, 64, 4
    $region29: #{tpu_custom_call.1} parent=1 // pred_fallthru
      _
    // Predicated region
    $region30: #{tpu_custom_call.1} parent=1 // pred_check
      _
    $region31: #{tpu_custom_call.1} parent=1 // pred_check_branch
      %88 = sbr.rel (0) target = $region33
    $region32: #{tpu_custom_call.1} parent=1 // pred_region
      _
    $region33: #{tpu_custom_call.1} parent=1 // pred_fallthru
      _
    // Predicated region
    $region34: #{tpu_custom_call.1} parent=1 // pred_check
      _
    $region35: #{tpu_custom_call.1} parent=1 // pred_check_branch
      %90 = sbr.rel (0) target = $region37
    $region36: #{tpu_custom_call.1} parent=1 // pred_region
      %s92 = ssub.s32 1024, 1024
      %93 = vsyncadd [#allocation12], %s92
      %s94 = sshll.u32 [#allocation11], 4
      %s95 = int_to_ptr.vmem [resolvable:$true] %s94
      %100 = dma.hbm_to_vmem [thread:$0]  %s8, 1024, %s95, [#allocation12], 64, 64, 4
    $region37: #{tpu_custom_call.1} parent=1 // pred_fallthru
      _
    // Predicated region
    $region38: #{tpu_custom_call.1} parent=1 // pred_check
      _
    $region39: #{tpu_custom_call.1} parent=1 // pred_check_branch
      %102 = sbr.rel (0) target = $region41
    $region40: #{tpu_custom_call.1} parent=1 // pred_region
      _
    $region41: #{tpu_custom_call.1} parent=1 // pred_fallthru
      _
    // Predicated region
    $region42: #{tpu_custom_call.1} parent=1 // pred_check
      _
    $region43: #{tpu_custom_call.1} parent=1 // pred_check_branch
      %104 = sbr.rel (0) target = $region45
    $region44: #{tpu_custom_call.1} parent=1 // pred_region
      %105 = dma.done [#allocation3], 128
    $region45: #{tpu_custom_call.1} parent=1 // pred_fallthru
      _
    // Predicated region
    $region46: #{tpu_custom_call.1} parent=1 // pred_check
      _
    $region47: #{tpu_custom_call.1} parent=1 // pred_check_branch
      %107 = sbr.rel (0) target = $region49
    $region48: #{tpu_custom_call.1} parent=1 // pred_region
      %108 = dma.done [#allocation6], 256
    $region49: #{tpu_custom_call.1} parent=1 // pred_fallthru
      _
    // Predicated region
    $region50: #{tpu_custom_call.1} parent=1 // pred_check
      _
    $region51: #{tpu_custom_call.1} parent=1 // pred_check_branch
      %110 = sbr.rel (0) target = $region53
    $region52: #{tpu_custom_call.1} parent=1 // pred_region
      %111 = dma.done [#allocation6], 1024
    $region53: #{tpu_custom_call.1} parent=1 // pred_fallthru
      _
    // Predicated region
    $region54: #{tpu_custom_call.1} parent=1 // pred_check
      _
    $region55: #{tpu_custom_call.1} parent=1 // pred_check_branch
      %113 = sbr.rel (0) target = $region57
    $region56: #{tpu_custom_call.1} parent=1 // pred_region
      %114 = dma.done [#allocation9], 2048
    $region57: #{tpu_custom_call.1} parent=1 // pred_fallthru
      _
    // Predicated region
    $region58: #{tpu_custom_call.1} parent=1 // pred_check
      _
    $region59: #{tpu_custom_call.1} parent=1 // pred_check_branch
      %116 = sbr.rel (0) target = $region61
    $region60: #{tpu_custom_call.1} parent=1 // pred_region
      %117 = dma.done [#allocation9], 1024
    $region61: #{tpu_custom_call.1} parent=1 // pred_fallthru
      _
    // Predicated region
    $region62: #{tpu_custom_call.1} parent=1 // pred_check
      _
    $region63: #{tpu_custom_call.1} parent=1 // pred_check_branch
      %119 = sbr.rel (0) target = $region65
    $region64: #{tpu_custom_call.1} parent=1 // pred_region
      %120 = dma.done [#allocation12], 1024
    $region65: #{tpu_custom_call.1} parent=1 // pred_fallthru
      _
    %v122 = vld [vmem:[#allocation2] sm:$0xf]
    %v123 = vld [vmem:[#allocation2 + $0x4] sm:$0xf]
    %v124 = vld [vmem:[#allocation7] sm:$0xf]
    %v125 = vld [vmem:[#allocation7 + $0x4] sm:$0xf]
    %v126 = vld [vmem:[#allocation7 + $0x8] sm:$0xf]
    %v127 = vld [vmem:[#allocation7 + $0xc] sm:$0xf]
    %v128 = vld [vmem:[#allocation7 + $0x10] sm:$0xf]
    %v129 = vld [vmem:[#allocation7 + $0x14] sm:$0xf]
    %v130 = vld [vmem:[#allocation7 + $0x18] sm:$0xf]
    %v131 = vld [vmem:[#allocation7 + $0x1c] sm:$0xf]
    %v132 = vld [vmem:[#allocation7 + $0x20] sm:$0xf]
    %v133 = vld [vmem:[#allocation7 + $0x24] sm:$0xf]
    %v134 = vld [vmem:[#allocation7 + $0x28] sm:$0xf]
    %v135 = vld [vmem:[#allocation7 + $0x2c] sm:$0xf]
    %v136 = vld [vmem:[#allocation7 + $0x30] sm:$0xf]
    %v137 = vld [vmem:[#allocation7 + $0x34] sm:$0xf]
    %v138 = vld [vmem:[#allocation7 + $0x38] sm:$0xf]
    %v139 = vld [vmem:[#allocation7 + $0x3c] sm:$0xf]
    %v140 = vld [vmem:[%s3] sm:$0x1]
    %v142 = vlaneseq
    %v143 = vshrl.u32 %v142, 7
    %v144 = vsub.s32 0, %v143
    %v145 = vrot.slane %v140, %v144
    %v149 = vunpack.c.l.b16 %v122
    %v150 = vunpack.c.l.b16 %v123
    %v151 = vpack.c.b16 %v150, %v149
    %v169 = vunpack.c.l.b16 %v124
    %v170 = vunpack.c.l.b16 %v125
    %v171 = vunpack.c.l.b16 %v126
    %v172 = vunpack.c.l.b16 %v127
    %v173 = vunpack.c.l.b16 %v128
    %v174 = vunpack.c.l.b16 %v129
    %v175 = vunpack.c.l.b16 %v130
    %v176 = vunpack.c.l.b16 %v131
    %v177 = vunpack.c.l.b16 %v132
    %v178 = vunpack.c.l.b16 %v133
    %v179 = vunpack.c.l.b16 %v134
    %v180 = vunpack.c.l.b16 %v135
    %v181 = vunpack.c.l.b16 %v136
    %v182 = vunpack.c.l.b16 %v137
    %v183 = vunpack.c.l.b16 %v138
    %v184 = vunpack.c.l.b16 %v139
    %v185 = vpack.c.b16 %v170, %v169
    %v186 = vpack.c.b16 %v172, %v171
    %v187 = vpack.c.b16 %v174, %v173
    %v188 = vpack.c.b16 %v176, %v175
    %v189 = vpack.c.b16 %v178, %v177
    %v190 = vpack.c.b16 %v180, %v179
    %v191 = vpack.c.b16 %v182, %v181
    %v192 = vpack.c.b16 %v184, %v183
    %201 = vmatprep.subr.bf16.mxu0 0
    %202 = vmatpush1.bf16.msra.mxu0 %v185
    %203 = vmatprep.subr.bf16.mxu0 0
    %204 = vmatpush1.bf16.msra.mxu0 %v186
    %205 = vmatprep.subr.bf16.mxu0 0
    %206 = vmatpush1.bf16.msra.mxu0 %v187
    %207 = vmatprep.subr.bf16.mxu0 0
    %208 = vmatpush1.bf16.msra.mxu0 %v188
    %209 = vmatprep.subr.bf16.mxu0 0
    %210 = vmatpush1.bf16.msra.mxu0 %v189
    %211 = vmatprep.subr.bf16.mxu0 0
    %212 = vmatpush1.bf16.msra.mxu0 %v190
    %213 = vmatprep.subr.bf16.mxu0 0
    %214 = vmatpush1.bf16.msra.mxu0 %v191
    %215 = vmatprep.subr.bf16.mxu0 0
    %216 = vmatpush1.bf16.msra.mxu0 %v192
    %217 = vmatprep.subr.bf16.mxu0 0
    %218 = vmatpush1.bf16.msra.mxu0 0
    %219 = vmatprep.subr.bf16.mxu0 0
    %220 = vmatpush1.bf16.msra.mxu0 0
    %221 = vmatprep.subr.bf16.mxu0 0
    %222 = vmatpush1.bf16.msra.mxu0 0
    %223 = vmatprep.subr.bf16.mxu0 0
    %224 = vmatpush1.bf16.msra.mxu0 0
    %225 = vmatprep.subr.bf16.mxu0 0
    %226 = vmatpush1.bf16.msra.mxu0 0
    %227 = vmatprep.subr.bf16.mxu0 0
    %228 = vmatpush1.bf16.msra.mxu0 0
    %229 = vmatprep.subr.bf16.mxu0 0
    %230 = vmatpush1.bf16.msra.mxu0 0
    %231 = vmatprep.subr.bf16.mxu0 0
    %232 = vmatpush1.bf16.msra.mxu0 0
    %233 = vmatprep.mubr.bf16.mxu0 0
    %234 = vmatmul.mubr.bf16.gmra.mrb[0].mxu0 %v151
    %v235 = vpop.f32.mrb[0].mxu0
    %v236 = vadd.f32 %v145, %v235
    %v237 = vpop.f32.mrb[0].mxu0
    %v238 = vpop.f32.mrb[0].mxu0
    %v239 = vadd.f32 %v145, %v238
    %v240 = vpop.f32.mrb[0].mxu0
    %241 = vdwg.mxu0
    %v242 = vmax.f32 %v236, 0.0
    %v243 = vmax.f32 %v239, 0.0
    %v244 = vpack.c.bf16 %v243, %v242
    %v245 = vld [vmem:[#allocation8] sm:$0xff]
    %v246 = vld [vmem:[#allocation8 + $0x8] sm:$0xff]
    %v247 = vld [vmem:[#allocation8 + $0x10] sm:$0xff]
    %v248 = vld [vmem:[#allocation8 + $0x18] sm:$0xff]
    %v249 = vld [vmem:[#allocation8 + $0x20] sm:$0xff]
    %v250 = vld [vmem:[#allocation8 + $0x28] sm:$0xff]
    %v251 = vld [vmem:[#allocation8 + $0x30] sm:$0xff]
    %v252 = vld [vmem:[#allocation8 + $0x38] sm:$0xff]
    %v253 = vld [vmem:[#allocation8 + $0x40] sm:$0xff]
    %v254 = vld [vmem:[#allocation8 + $0x48] sm:$0xff]
    %v255 = vld [vmem:[#allocation8 + $0x50] sm:$0xff]
    %v256 = vld [vmem:[#allocation8 + $0x58] sm:$0xff]
    %v257 = vld [vmem:[#allocation8 + $0x60] sm:$0xff]
    %v258 = vld [vmem:[#allocation8 + $0x68] sm:$0xff]
    %v259 = vld [vmem:[#allocation8 + $0x70] sm:$0xff]
    %v260 = vld [vmem:[#allocation8 + $0x78] sm:$0xff]
    %v261 = vld [vmem:[%s5] sm:$0x3]
    %v263 = vlaneseq
    %v264 = vshrl.u32 %v263, 7
    %v265 = vsub.s32 0, %v264
    %v266 = vrot.slane %v261, %v265
    %v267 = vlaneseq
    %v268 = vshrl.u32 %v267, 7
    %v269 = vsub.s32 1, %v268
    %v270 = vrot.slane %v261, %v269
    %v289 = vunpack.c.l.b16 %v245
    %v290 = vunpack.c.h.b16 %v245
    %v291 = vunpack.c.l.b16 %v246
    %v292 = vunpack.c.h.b16 %v246
    %v293 = vunpack.c.l.b16 %v247
    %v294 = vunpack.c.h.b16 %v247
    %v295 = vunpack.c.l.b16 %v248
    %v296 = vunpack.c.h.b16 %v248
    %v297 = vunpack.c.l.b16 %v249
    %v298 = vunpack.c.h.b16 %v249
    %v299 = vunpack.c.l.b16 %v250
    %v300 = vunpack.c.h.b16 %v250
    %v301 = vunpack.c.l.b16 %v251
    %v302 = vunpack.c.h.b16 %v251
    %v303 = vunpack.c.l.b16 %v252
    %v304 = vunpack.c.h.b16 %v252
    %v305 = vunpack.c.l.b16 %v253
    %v306 = vunpack.c.h.b16 %v253
    %v307 = vunpack.c.l.b16 %v254
    %v308 = vunpack.c.h.b16 %v254
    %v309 = vunpack.c.l.b16 %v255
    %v310 = vunpack.c.h.b16 %v255
    %v311 = vunpack.c.l.b16 %v256
    %v312 = vunpack.c.h.b16 %v256
    %v313 = vunpack.c.l.b16 %v257
    %v314 = vunpack.c.h.b16 %v257
    %v315 = vunpack.c.l.b16 %v258
    %v316 = vunpack.c.h.b16 %v258
    %v317 = vunpack.c.l.b16 %v259
    %v318 = vunpack.c.h.b16 %v259
    %v319 = vunpack.c.l.b16 %v260
    %v320 = vunpack.c.h.b16 %v260
    %v321 = vpack.c.b16 %v291, %v289
    %v322 = vpack.c.b16 %v292, %v290
    %v323 = vpack.c.b16 %v295, %v293
    %v324 = vpack.c.b16 %v296, %v294
    %v325 = vpack.c.b16 %v299, %v297
    %v326 = vpack.c.b16 %v300, %v298
    %v327 = vpack.c.b16 %v303, %v301
    %v328 = vpack.c.b16 %v304, %v302
    %v329 = vpack.c.b16 %v307, %v305
    %v330 = vpack.c.b16 %v308, %v306
    %v331 = vpack.c.b16 %v311, %v309
    %v332 = vpack.c.b16 %v312, %v310
    %v333 = vpack.c.b16 %v315, %v313
    %v334 = vpack.c.b16 %v316, %v314
    %v335 = vpack.c.b16 %v319, %v317
    %v336 = vpack.c.b16 %v320, %v318
    %353 = vmatprep.subr.bf16.mxu0 %v322
    %354 = vmatpush1.bf16.msra.mxu0 %v321
    %355 = vmatprep.subr.bf16.mxu0 %v324
    %356 = vmatpush1.bf16.msra.mxu0 %v323
    %357 = vmatprep.subr.bf16.mxu0 %v326
    %358 = vmatpush1.bf16.msra.mxu0 %v325
    %359 = vmatprep.subr.bf16.mxu0 %v328
    %360 = vmatpush1.bf16.msra.mxu0 %v327
    %361 = vmatprep.subr.bf16.mxu0 %v330
    %362 = vmatpush1.bf16.msra.mxu0 %v329
    %363 = vmatprep.subr.bf16.mxu0 %v332
    %364 = vmatpush1.bf16.msra.mxu0 %v331
    %365 = vmatprep.subr.bf16.mxu0 %v334
    %366 = vmatpush1.bf16.msra.mxu0 %v333
    %367 = vmatprep.subr.bf16.mxu0 %v336
    %368 = vmatpush1.bf16.msra.mxu0 %v335
    %369 = vmatprep.subr.bf16.mxu0 0
    %370 = vmatpush1.bf16.msra.mxu0 0
    %371 = vmatprep.subr.bf16.mxu0 0
    %372 = vmatpush1.bf16.msra.mxu0 0
    %373 = vmatprep.subr.bf16.mxu0 0
    %374 = vmatpush1.bf16.msra.mxu0 0
    %375 = vmatprep.subr.bf16.mxu0 0
    %376 = vmatpush1.bf16.msra.mxu0 0
    %377 = vmatprep.subr.bf16.mxu0 0
    %378 = vmatpush1.bf16.msra.mxu0 0
    %379 = vmatprep.subr.bf16.mxu0 0
    %380 = vmatpush1.bf16.msra.mxu0 0
    %381 = vmatprep.subr.bf16.mxu0 0
    %382 = vmatpush1.bf16.msra.mxu0 0
    %383 = vmatprep.subr.bf16.mxu0 0
    %384 = vmatpush1.bf16.msra.mxu0 0
    %385 = vmatprep.mubr.bf16.mxu0 0
    %386 = vmatmul.mubr.bf16.gmra.mrb[0].mxu0 %v244
    %v387 = vpop.f32.mrb[0].mxu0
    %v388 = vadd.f32 %v266, %v387
    %v389 = vpop.f32.mrb[0].mxu0
    %v390 = vadd.f32 %v270, %v389
    %v391 = vpop.f32.mrb[0].mxu0
    %v392 = vadd.f32 %v266, %v391
    %v393 = vpop.f32.mrb[0].mxu0
    %v394 = vadd.f32 %v270, %v393
    %395 = vdwg.mxu0
    %v396 = vld [vmem:[#allocation5] sm:$0xff]
    %v397 = vld [vmem:[#allocation5 + $0x8] sm:$0xff]
    %v398 = vmul.f32 %v390, 0.5
    %v399 = vmul.f32 %v394, 0.5
    %v400 = vmul.f32 %v398, 1.442695
    %v401 = vpow.pop %v400
    %v402 = vmul.f32 %v399, 1.442695
    %v403 = vpow.pop %v402
    %v404 = vmul.f32 %v396, %v401
    %v405 = vmul.f32 %v397, %v403
    %v406 = vadd.f32 %v388, %v404
    %v407 = vadd.f32 %v392, %v405
    %v408 = vpack.c.bf16 %v407, %v406
    %v409 = vld [vmem:[#allocation10] sm:$0xf]
    %v410 = vld [vmem:[#allocation10 + $0x4] sm:$0xf]
    %v411 = vld [vmem:[#allocation10 + $0x8] sm:$0xf]
    %v412 = vld [vmem:[#allocation10 + $0xc] sm:$0xf]
    %v413 = vld [vmem:[#allocation10 + $0x10] sm:$0xf]
    %v414 = vld [vmem:[#allocation10 + $0x14] sm:$0xf]
    %v415 = vld [vmem:[#allocation10 + $0x18] sm:$0xf]
    %v416 = vld [vmem:[#allocation10 + $0x1c] sm:$0xf]
    %v417 = vld [vmem:[#allocation10 + $0x20] sm:$0xf]
    %v418 = vld [vmem:[#allocation10 + $0x24] sm:$0xf]
    %v419 = vld [vmem:[#allocation10 + $0x28] sm:$0xf]
    %v420 = vld [vmem:[#allocation10 + $0x2c] sm:$0xf]
    %v421 = vld [vmem:[#allocation10 + $0x30] sm:$0xf]
    %v422 = vld [vmem:[#allocation10 + $0x34] sm:$0xf]
    %v423 = vld [vmem:[#allocation10 + $0x38] sm:$0xf]
    %v424 = vld [vmem:[#allocation10 + $0x3c] sm:$0xf]
    %v425 = vld [vmem:[%s7] sm:$0x1]
    %v427 = vlaneseq
    %v428 = vshrl.u32 %v427, 7
    %v429 = vsub.s32 0, %v428
    %v430 = vrot.slane %v425, %v429
    %v448 = vunpack.c.l.b16 %v409
    %v449 = vunpack.c.l.b16 %v410
    %v450 = vunpack.c.l.b16 %v411
    %v451 = vunpack.c.l.b16 %v412
    %v452 = vunpack.c.l.b16 %v413
    %v453 = vunpack.c.l.b16 %v414
    %v454 = vunpack.c.l.b16 %v415
    %v455 = vunpack.c.l.b16 %v416
    %v456 = vunpack.c.l.b16 %v417
    %v457 = vunpack.c.l.b16 %v418
    %v458 = vunpack.c.l.b16 %v419
    %v459 = vunpack.c.l.b16 %v420
    %v460 = vunpack.c.l.b16 %v421
    %v461 = vunpack.c.l.b16 %v422
    %v462 = vunpack.c.l.b16 %v423
    %v463 = vunpack.c.l.b16 %v424
    %v464 = vpack.c.b16 %v449, %v448
    %v465 = vpack.c.b16 %v451, %v450
    %v466 = vpack.c.b16 %v453, %v452
    %v467 = vpack.c.b16 %v455, %v454
    %v468 = vpack.c.b16 %v457, %v456
    %v469 = vpack.c.b16 %v459, %v458
    %v470 = vpack.c.b16 %v461, %v460
    %v471 = vpack.c.b16 %v463, %v462
    %480 = vmatprep.subr.bf16.mxu0 0
    %481 = vmatpush1.bf16.msra.mxu0 %v464
    %482 = vmatprep.subr.bf16.mxu0 0
    %483 = vmatpush1.bf16.msra.mxu0 %v465
    %484 = vmatprep.subr.bf16.mxu0 0
    %485 = vmatpush1.bf16.msra.mxu0 %v466
    %486 = vmatprep.subr.bf16.mxu0 0
    %487 = vmatpush1.bf16.msra.mxu0 %v467
    %488 = vmatprep.subr.bf16.mxu0 0
    %489 = vmatpush1.bf16.msra.mxu0 %v468
    %490 = vmatprep.subr.bf16.mxu0 0
    %491 = vmatpush1.bf16.msra.mxu0 %v469
    %492 = vmatprep.subr.bf16.mxu0 0
    %493 = vmatpush1.bf16.msra.mxu0 %v470
    %494 = vmatprep.subr.bf16.mxu0 0
    %495 = vmatpush1.bf16.msra.mxu0 %v471
    %496 = vmatprep.subr.bf16.mxu0 0
    %497 = vmatpush1.bf16.msra.mxu0 0
    %498 = vmatprep.subr.bf16.mxu0 0
    %499 = vmatpush1.bf16.msra.mxu0 0
    %500 = vmatprep.subr.bf16.mxu0 0
    %501 = vmatpush1.bf16.msra.mxu0 0
    %502 = vmatprep.subr.bf16.mxu0 0
    %503 = vmatpush1.bf16.msra.mxu0 0
    %504 = vmatprep.subr.bf16.mxu0 0
    %505 = vmatpush1.bf16.msra.mxu0 0
    %506 = vmatprep.subr.bf16.mxu0 0
    %507 = vmatpush1.bf16.msra.mxu0 0
    %508 = vmatprep.subr.bf16.mxu0 0
    %509 = vmatpush1.bf16.msra.mxu0 0
    %510 = vmatprep.subr.bf16.mxu0 0
    %511 = vmatpush1.bf16.msra.mxu0 0
    %512 = vmatprep.mubr.bf16.mxu0 0
    %513 = vmatmul.mubr.bf16.gmra.mrb[0].mxu0 %v408
    %v514 = vpop.f32.mrb[0].mxu0
    %v515 = vadd.f32 %v430, %v514
    %v516 = vpop.f32.mrb[0].mxu0
    %v517 = vpop.f32.mrb[0].mxu0
    %v518 = vadd.f32 %v430, %v517
    %v519 = vpop.f32.mrb[0].mxu0
    %520 = vdwg.mxu0
    %v521 = vmax.f32 %v515, 0.0
    %v522 = vmax.f32 %v518, 0.0
    %v523 = vpack.c.bf16 %v522, %v521
    %v524 = vld [vmem:[#allocation11] sm:$0xf]
    %v525 = vld [vmem:[#allocation11 + $0x4] sm:$0xf]
    %v526 = vld [vmem:[#allocation11 + $0x8] sm:$0xf]
    %v527 = vld [vmem:[#allocation11 + $0xc] sm:$0xf]
    %v528 = vld [vmem:[#allocation11 + $0x10] sm:$0xf]
    %v529 = vld [vmem:[#allocation11 + $0x14] sm:$0xf]
    %v530 = vld [vmem:[#allocation11 + $0x18] sm:$0xf]
    %v531 = vld [vmem:[#allocation11 + $0x1c] sm:$0xf]
    %v532 = vld [vmem:[#allocation11 + $0x20] sm:$0xf]
    %v533 = vld [vmem:[#allocation11 + $0x24] sm:$0xf]
    %v534 = vld [vmem:[#allocation11 + $0x28] sm:$0xf]
    %v535 = vld [vmem:[#allocation11 + $0x2c] sm:$0xf]
    %v536 = vld [vmem:[#allocation11 + $0x30] sm:$0xf]
    %v537 = vld [vmem:[#allocation11 + $0x34] sm:$0xf]
    %v538 = vld [vmem:[#allocation11 + $0x38] sm:$0xf]
    %v539 = vld [vmem:[#allocation11 + $0x3c] sm:$0xf]
    %v540 = vld [vmem:[%s9] sm:$0x1]
    %v542 = vlaneseq
    %v543 = vshrl.u32 %v542, 7
    %v544 = vsub.s32 0, %v543
    %v545 = vrot.slane %v540, %v544
    %v563 = vunpack.c.l.b16 %v524
    %v564 = vunpack.c.l.b16 %v525
    %v565 = vunpack.c.l.b16 %v526
    %v566 = vunpack.c.l.b16 %v527
    %v567 = vunpack.c.l.b16 %v528
    %v568 = vunpack.c.l.b16 %v529
    %v569 = vunpack.c.l.b16 %v530
    %v570 = vunpack.c.l.b16 %v531
    %v571 = vunpack.c.l.b16 %v532
    %v572 = vunpack.c.l.b16 %v533
    %v573 = vunpack.c.l.b16 %v534
    %v574 = vunpack.c.l.b16 %v535
    %v575 = vunpack.c.l.b16 %v536
    %v576 = vunpack.c.l.b16 %v537
    %v577 = vunpack.c.l.b16 %v538
    %v578 = vunpack.c.l.b16 %v539
    %v579 = vpack.c.b16 %v564, %v563
    %v580 = vpack.c.b16 %v566, %v565
    %v581 = vpack.c.b16 %v568, %v567
    %v582 = vpack.c.b16 %v570, %v569
    %v583 = vpack.c.b16 %v572, %v571
    %v584 = vpack.c.b16 %v574, %v573
    %v585 = vpack.c.b16 %v576, %v575
    %v586 = vpack.c.b16 %v578, %v577
    %595 = vmatprep.subr.bf16.mxu0 0
    %596 = vmatpush1.bf16.msra.mxu0 %v579
    %597 = vmatprep.subr.bf16.mxu0 0
    %598 = vmatpush1.bf16.msra.mxu0 %v580
    %599 = vmatprep.subr.bf16.mxu0 0
    %600 = vmatpush1.bf16.msra.mxu0 %v581
    %601 = vmatprep.subr.bf16.mxu0 0
    %602 = vmatpush1.bf16.msra.mxu0 %v582
    %603 = vmatprep.subr.bf16.mxu0 0
    %604 = vmatpush1.bf16.msra.mxu0 %v583
    %605 = vmatprep.subr.bf16.mxu0 0
    %606 = vmatpush1.bf16.msra.mxu0 %v584
    %607 = vmatprep.subr.bf16.mxu0 0
    %608 = vmatpush1.bf16.msra.mxu0 %v585
    %609 = vmatprep.subr.bf16.mxu0 0
    %610 = vmatpush1.bf16.msra.mxu0 %v586
    %611 = vmatprep.subr.bf16.mxu0 0
    %612 = vmatpush1.bf16.msra.mxu0 0
    %613 = vmatprep.subr.bf16.mxu0 0
    %614 = vmatpush1.bf16.msra.mxu0 0
    %615 = vmatprep.subr.bf16.mxu0 0
    %616 = vmatpush1.bf16.msra.mxu0 0
    %617 = vmatprep.subr.bf16.mxu0 0
    %618 = vmatpush1.bf16.msra.mxu0 0
    %619 = vmatprep.subr.bf16.mxu0 0
    %620 = vmatpush1.bf16.msra.mxu0 0
    %621 = vmatprep.subr.bf16.mxu0 0
    %622 = vmatpush1.bf16.msra.mxu0 0
    %623 = vmatprep.subr.bf16.mxu0 0
    %624 = vmatpush1.bf16.msra.mxu0 0
    %625 = vmatprep.subr.bf16.mxu0 0
    %626 = vmatpush1.bf16.msra.mxu0 0
    %627 = vmatprep.mubr.bf16.mxu0 0
    %628 = vmatmul.mubr.bf16.gmra.mrb[0].mxu0 %v523
    %v629 = vpop.f32.mrb[0].mxu0
    %v630 = vadd.f32 %v545, %v629
    %v631 = vpop.f32.mrb[0].mxu0
    %v632 = vpop.f32.mrb[0].mxu0
    %v633 = vadd.f32 %v545, %v632
    %v634 = vpop.f32.mrb[0].mxu0
    %635 = vdwg.mxu0
    %v636 = vxor.u32 %v630, 2147483648
    %v637 = vxor.u32 %v633, 2147483648
    %v638 = vmul.f32 %v636, 1.442695
    %v639 = vpow.pop %v638
    %v640 = vmul.f32 %v637, 1.442695
    %v641 = vpow.pop %v640
    %v642 = vadd.f32 %v639, 1.0
    %v643 = vadd.f32 %v641, 1.0
    %v644 = vrcp.pop %v642
    %v645 = vmul.f32 1.0, %v644
    %v646 = vrcp.pop %v643
    %v647 = vmul.f32 1.0, %v646
    %648 = vst [vmem:[#allocation13] sm:$0xff] %v645
    %649 = vst [vmem:[#allocation13 + $0x8] sm:$0xff] %v647
    %650 = vst [vmem:[#allocation14] sm:$0xff] %v388
    %651 = vst [vmem:[#allocation14 + $0x8] sm:$0xff] %v390
    %652 = vst [vmem:[#allocation14 + $0x10] sm:$0xff] %v392
    %653 = vst [vmem:[#allocation14 + $0x18] sm:$0xff] %v394
    // Predicated region
    $region66: #{tpu_custom_call.1} parent=1 // pred_check
      _
    $region67: #{tpu_custom_call.1} parent=1 // pred_check_branch
      %655 = sbr.rel (0) target = $region69
    $region68: #{tpu_custom_call.1} parent=1 // pred_region
      %s657 = ssub.s32 256, 256
      %658 = vsyncadd [#allocation4], %s657
      %s659 = sshll.u32 [#allocation13], 4
      %s660 = int_to_ptr.vmem [resolvable:$true] %s659
      %665 = dma.vmem_to_hbm [thread:$0]  %s660, 256, %s10, [#allocation4], 128, 128, 8
    $region69: #{tpu_custom_call.1} parent=1 // pred_fallthru
      _
    // Predicated region
    $region70: #{tpu_custom_call.1} parent=1 // pred_check
      _
    $region71: #{tpu_custom_call.1} parent=1 // pred_check_branch
      %667 = sbr.rel (0) target = $region73
    $region72: #{tpu_custom_call.1} parent=1 // pred_region
      %s669 = ssub.s32 512, 512
      %670 = vsyncadd [#allocation15], %s669
      %s671 = sshll.u32 [#allocation14], 4
      %s672 = int_to_ptr.vmem [resolvable:$true] %s671
      %677 = dma.vmem_to_hbm [thread:$0]  %s672, 512, %s11, [#allocation15], 256, 256, 16
    $region73: #{tpu_custom_call.1} parent=1 // pred_fallthru
      _
    // Predicated region
    $region74: #{tpu_custom_call.1} parent=1 // pred_check
      _
    $region75: #{tpu_custom_call.1} parent=1 // pred_check_branch
      %679 = sbr.rel (0) target = $region77
    $region76: #{tpu_custom_call.1} parent=1 // pred_region
      %680 = dma.done [#allocation4], 256
    $region77: #{tpu_custom_call.1} parent=1 // pred_fallthru
      _
    // Predicated region
    $region78: #{tpu_custom_call.1} parent=1 // pred_check
      _
    $region79: #{tpu_custom_call.1} parent=1 // pred_check_branch
      %682 = sbr.rel (0) target = $region81
    $region80: #{tpu_custom_call.1} parent=1 // pred_region
      %683 = dma.done [#allocation15], 512
    $region81: #{tpu_custom_call.1} parent=1 // pred_fallthru
      _
    %684 = vsyncpa [#allocation3], 1
    %685 = vsyncpa [#allocation6], 1
    %686 = vsyncpa [#allocation9], 1
    %687 = vsyncpa [#allocation12], 1
    %688 = vsyncpa [#allocation4], 1
    %689 = vsyncpa [#allocation15], 1

// kernel: tpu_custom_call.1
$region0: #{tpu_custom_call.1}
  #allocation0 [shape = 'u32[]', space=smem, size = 0x4, offset = 0x4, fixed_abs, tag = 'smem constant byte address 0x4 - core index']
  #allocation1 [shape = 'u32[144,128]{1,0:T(1,128)}', space=vmem, size = 0x12000, scoped, tag = 'internal scratch']
  %s0 = inlined_call_operand.hbm [shape: bf16[16,128], index: 0, kind: input, shape index: {}]
  %s1 = inlined_call_operand.hbm [shape: f32[16,128], index: 1, kind: input, shape index: {}]
  %s2 = inlined_call_operand.hbm [shape: bf16[128,128], index: 2, kind: input, shape index: {}]
  %s3 = inlined_call_operand.vmem [shape: f32[1,128], index: 3, kind: input, shape index: {}]
  %s4 = inlined_call_operand.hbm [shape: bf16[128,256], index: 4, kind: input, shape index: {}]
  %s5 = inlined_call_operand.vmem [shape: f32[1,256], index: 5, kind: input, shape index: {}]
  %s6 = inlined_call_operand.hbm [shape: bf16[128,128], index: 6, kind: input, shape index: {}]
  %s7 = inlined_call_operand.vmem [shape: f32[1,128], index: 7, kind: input, shape index: {}]
  %s8 = inlined_call_operand.hbm [shape: bf16[128,128], index: 8, kind: input, shape index: {}]
  %s9 = inlined_call_operand.vmem [shape: f32[1,128], index: 9, kind: input, shape index: {}]
  %s10 = inlined_call_operand.hbm [shape: f32[16,128], index: 10, kind: output, shape index: {0}]
  %s11 = inlined_call_operand.hbm [shape: f32[16,256], index: 11, kind: output, shape index: {1}]
  %12 = xla_tuple %s10, %s11
  %s13 = sld [smem:[#allocation0]]
  $region82: #{tpu_custom_call.1} parent=0
    _
  %s15 = ssub.s32 1, %s13
  %s16 = scalar_select 0, %s15, %s13
  $region1: #{tpu_custom_call.1} parent=0
    #allocation2 [shape = 'u8[4096]{0}', space=vmem, size = 0x1000, scoped, tag = 'input window, operand 0, single buffered']
    #allocation3 [shape = 's32[1]{0}', space=sflag, size = 0x4, scoped, tag = 'scoped memory for tpu_custom_call.1']
    #allocation4 [shape = 's32[1]{0}', space=sflag, size = 0x4, scoped, tag = 'scoped memory for tpu_custom_call.1']
    #allocation5 [shape = 'u8[8192]{0}', space=vmem, size = 0x2000, scoped, tag = 'input window, operand 1, single buffered']
    #allocation6 [shape = 's32[1]{0}', space=sflag, size = 0x4, scoped, tag = 'scoped memory for tpu_custom_call.1']
    #allocation7 [shape = 'u8[32768]{0}', space=vmem, size = 0x8000, scoped, tag = 'input window, operand 2, single buffered']
    #allocation8 [shape = 'u8[65536]{0}', space=vmem, size = 0x10000, scoped, tag = 'input window, operand 4, single buffered']
    #allocation9 [shape = 's32[1]{0}', space=sflag, size = 0x4, scoped, tag = 'scoped memory for tpu_custom_call.1']
    #allocation10 [shape = 'u8[32768]{0}', space=vmem, size = 0x8000, scoped, tag = 'input window, operand 6, single buffered']
    #allocation11 [shape = 'u8[32768]{0}', space=vmem, size = 0x8000, scoped, tag = 'input window, operand 8, single buffered']
    #allocation12 [shape = 's32[1]{0}', space=sflag, size = 0x4, scoped, tag = 'scoped memory for tpu_custom_call.1']
    #allocation13 [shape = 'u8[8192]{0}', space=vmem, size = 0x2000, scoped, tag = 'output window, operand 0, single buffered']
    #allocation14 [shape = 'u8[16384]{0}', space=vmem, size = 0x4000, scoped, tag = 'output window, operand 1, single buffered']
    #allocation15 [shape = 's32[1]{0}', space=sflag, size = 0x4, scoped, tag = 'scoped memory for tpu_custom_call.1']
    %17 = vsyncpa [#allocation3], 0
    %18 = vsyncpa [#allocation6], 0
    %19 = vsyncpa [#allocation9], 0
    %20 = vsyncpa [#allocation12], 0
    %21 = vsyncpa [#allocation4], 0
    %22 = vsyncpa [#allocation15], 0
    // Predicated region
    $region2: #{tpu_custom_call.1} parent=1 // pred_check
      _
    $region3: #{tpu_custom_call.1} parent=1 // pred_check_branch
      %24 = sbr.rel (0) target = $region5
    $region4: #{tpu_custom_call.1} parent=1 // pred_region
      %s26 = ssub.s32 128, 128
      %27 = vsyncadd [#allocation3], %s26
      %s28 = sshll.u32 [#allocation2], 4
      %s29 = int_to_ptr.vmem [resolvable:$true] %s28
      %34 = dma.hbm_to_vmem [thread:$0]  %s0, 128, %s29, [#allocation3], 64, 64, 4
    $region5: #{tpu_custom_call.1} parent=1 // pred_fallthru
      _
    // Predicated region
    $region6: #{tpu_custom_call.1} parent=1 // pred_check
      _
    $region7: #{tpu_custom_call.1} parent=1 // pred_check_branch
      %36 = sbr.rel (0) target = $region9
    $region8: #{tpu_custom_call.1} parent=1 // pred_region
      %s38 = ssub.s32 256, 256
      %39 = vsyncadd [#allocation6], %s38
      %s40 = sshll.u32 [#allocation5], 4
      %s41 = int_to_ptr.vmem [resolvable:$true] %s40
      %46 = dma.hbm_to_vmem [thread:$0]  %s1, 256, %s41, [#allocation6], 128, 128, 8
    $region9: #{tpu_custom_call.1} parent=1 // pred_fallthru
      _
    // Predicated region
    $region10: #{tpu_custom_call.1} parent=1 // pred_check
      _
    $region11: #{tpu_custom_call.1} parent=1 // pred_check_branch
      %48 = sbr.rel (0) target = $region13
    $region12: #{tpu_custom_call.1} parent=1 // pred_region
      %s50 = ssub.s32 1024, 1024
      %51 = vsyncadd [#allocation6], %s50
      %s52 = sshll.u32 [#allocation7], 4
      %s53 = int_to_ptr.vmem [resolvable:$true] %s52
      %58 = dma.hbm_to_vmem [thread:$0]  %s2, 1024, %s53, [#allocation6], 64, 64, 4
    $region13: #{tpu_custom_call.1} parent=1 // pred_fallthru
      _
    // Predicated region
    $region14: #{tpu_custom_call.1} parent=1 // pred_check
      _
    $region15: #{tpu_custom_call.1} parent=1 // pred_check_branch
      %60 = sbr.rel (0) target = $region17
    $region16: #{tpu_custom_call.1} parent=1 // pred_region
      _
    $region17: #{tpu_custom_call.1} parent=1 // pred_fallthru
      _
    // Predicated region
    $region18: #{tpu_custom_call.1} parent=1 // pred_check
      _
    $region19: #{tpu_custom_call.1} parent=1 // pred_check_branch
      %62 = sbr.rel (0) target = $region21
    $region20: #{tpu_custom_call.1} parent=1 // pred_region
      %s64 = ssub.s32 2048, 2048
      %65 = vsyncadd [#allocation9], %s64
      %s66 = sshll.u32 [#allocation8], 4
      %s67 = int_to_ptr.vmem [resolvable:$true] %s66
      %72 = dma.hbm_to_vmem [thread:$0]  %s4, 2048, %s67, [#allocation9], 128, 128, 8
    $region21: #{tpu_custom_call.1} parent=1 // pred_fallthru
      _
    // Predicated region
    $region22: #{tpu_custom_call.1} parent=1 // pred_check
      _
    $region23: #{tpu_custom_call.1} parent=1 // pred_check_branch
      %74 = sbr.rel (0) target = $region25
    $region24: #{tpu_custom_call.1} parent=1 // pred_region
      _
    $region25: #{tpu_custom_call.1} parent=1 // pred_fallthru
      _
    // Predicated region
    $region26: #{tpu_custom_call.1} parent=1 // pred_check
      _
    $region27: #{tpu_custom_call.1} parent=1 // pred_check_branch
      %76 = sbr.rel (0) target = $region29
    $region28: #{tpu_custom_call.1} parent=1 // pred_region
      %s78 = ssub.s32 1024, 1024
      %79 = vsyncadd [#allocation9], %s78
      %s80 = sshll.u32 [#allocation10], 4
      %s81 = int_to_ptr.vmem [resolvable:$true] %s80
      %86 = dma.hbm_to_vmem [thread:$0]  %s6, 1024, %s81, [#allocation9], 64, 64, 4
    $region29: #{tpu_custom_call.1} parent=1 // pred_fallthru
      _
    // Predicated region
    $region30: #{tpu_custom_call.1} parent=1 // pred_check
      _
    $region31: #{tpu_custom_call.1} parent=1 // pred_check_branch
      %88 = sbr.rel (0) target = $region33
    $region32: #{tpu_custom_call.1} parent=1 // pred_region
      _
    $region33: #{tpu_custom_call.1} parent=1 // pred_fallthru
      _
    // Predicated region
    $region34: #{tpu_custom_call.1} parent=1 // pred_check
      _
    $region35: #{tpu_custom_call.1} parent=1 // pred_check_branch
      %90 = sbr.rel (0) target = $region37
    $region36: #{tpu_custom_call.1} parent=1 // pred_region
      %s92 = ssub.s32 1024, 1024
      %93 = vsyncadd [#allocation12], %s92
      %s94 = sshll.u32 [#allocation11], 4
      %s95 = int_to_ptr.vmem [resolvable:$true] %s94
      %100 = dma.hbm_to_vmem [thread:$0]  %s8, 1024, %s95, [#allocation12], 64, 64, 4
    $region37: #{tpu_custom_call.1} parent=1 // pred_fallthru
      _
    // Predicated region
    $region38: #{tpu_custom_call.1} parent=1 // pred_check
      _
    $region39: #{tpu_custom_call.1} parent=1 // pred_check_branch
      %102 = sbr.rel (0) target = $region41
    $region40: #{tpu_custom_call.1} parent=1 // pred_region
      _
    $region41: #{tpu_custom_call.1} parent=1 // pred_fallthru
      _
    // Predicated region
    $region42: #{tpu_custom_call.1} parent=1 // pred_check
      _
    $region43: #{tpu_custom_call.1} parent=1 // pred_check_branch
      %104 = sbr.rel (0) target = $region45
    $region44: #{tpu_custom_call.1} parent=1 // pred_region
      %105 = dma.done [#allocation3], 128
    $region45: #{tpu_custom_call.1} parent=1 // pred_fallthru
      _
    // Predicated region
    $region46: #{tpu_custom_call.1} parent=1 // pred_check
      _
    $region47: #{tpu_custom_call.1} parent=1 // pred_check_branch
      %107 = sbr.rel (0) target = $region49
    $region48: #{tpu_custom_call.1} parent=1 // pred_region
      %108 = dma.done [#allocation6], 256
    $region49: #{tpu_custom_call.1} parent=1 // pred_fallthru
      _
    // Predicated region
    $region50: #{tpu_custom_call.1} parent=1 // pred_check
      _
    $region51: #{tpu_custom_call.1} parent=1 // pred_check_branch
      %110 = sbr.rel (0) target = $region53
    $region52: #{tpu_custom_call.1} parent=1 // pred_region
      %111 = dma.done [#allocation6], 1024
    $region53: #{tpu_custom_call.1} parent=1 // pred_fallthru
      _
    // Predicated region
    $region54: #{tpu_custom_call.1} parent=1 // pred_check
      _
    $region55: #{tpu_custom_call.1} parent=1 // pred_check_branch
      %113 = sbr.rel (0) target = $region57
    $region56: #{tpu_custom_call.1} parent=1 // pred_region
      %114 = dma.done [#allocation9], 2048
    $region57: #{tpu_custom_call.1} parent=1 // pred_fallthru
      _
    // Predicated region
    $region58: #{tpu_custom_call.1} parent=1 // pred_check
      _
    $region59: #{tpu_custom_call.1} parent=1 // pred_check_branch
      %116 = sbr.rel (0) target = $region61
    $region60: #{tpu_custom_call.1} parent=1 // pred_region
      %117 = dma.done [#allocation9], 1024
    $region61: #{tpu_custom_call.1} parent=1 // pred_fallthru
      _
    // Predicated region
    $region62: #{tpu_custom_call.1} parent=1 // pred_check
      _
    $region63: #{tpu_custom_call.1} parent=1 // pred_check_branch
      %119 = sbr.rel (0) target = $region65
    $region64: #{tpu_custom_call.1} parent=1 // pred_region
      %120 = dma.done [#allocation12], 1024
    $region65: #{tpu_custom_call.1} parent=1 // pred_fallthru
      _
    %v122 = vld [vmem:[#allocation2] sm:$0xf]
    %v123 = vld [vmem:[#allocation2 + $0x4] sm:$0xf]
    %v124 = vld [vmem:[#allocation7] sm:$0xf]
    %v125 = vld [vmem:[#allocation7 + $0x4] sm:$0xf]
    %v126 = vld [vmem:[#allocation7 + $0x8] sm:$0xf]
    %v127 = vld [vmem:[#allocation7 + $0xc] sm:$0xf]
    %v128 = vld [vmem:[#allocation7 + $0x10] sm:$0xf]
    %v129 = vld [vmem:[#allocation7 + $0x14] sm:$0xf]
    %v130 = vld [vmem:[#allocation7 + $0x18] sm:$0xf]
    %v131 = vld [vmem:[#allocation7 + $0x1c] sm:$0xf]
    %v132 = vld [vmem:[#allocation7 + $0x20] sm:$0xf]
    %v133 = vld [vmem:[#allocation7 + $0x24] sm:$0xf]
    %v134 = vld [vmem:[#allocation7 + $0x28] sm:$0xf]
    %v135 = vld [vmem:[#allocation7 + $0x2c] sm:$0xf]
    %v136 = vld [vmem:[#allocation7 + $0x30] sm:$0xf]
    %v137 = vld [vmem:[#allocation7 + $0x34] sm:$0xf]
    %v138 = vld [vmem:[#allocation7 + $0x38] sm:$0xf]
    %v139 = vld [vmem:[#allocation7 + $0x3c] sm:$0xf]
    %v140 = vld [vmem:[%s3] sm:$0x1]
    %v142 = vlaneseq
    %v143 = vshrl.u32 %v142, 7
    %v144 = vsub.s32 0, %v143
    %v145 = vrot.slane %v140, %v144
    %v149 = vunpack.c.l.b16 %v122
    %v150 = vunpack.c.l.b16 %v123
    %v151 = vpack.c.b16 %v150, %v149
    %v169 = vunpack.c.l.b16 %v124
    %v170 = vunpack.c.l.b16 %v125
    %v171 = vunpack.c.l.b16 %v126
    %v172 = vunpack.c.l.b16 %v127
    %v173 = vunpack.c.l.b16 %v128
    %v174 = vunpack.c.l.b16 %v129
    %v175 = vunpack.c.l.b16 %v130
    %v176 = vunpack.c.l.b16 %v131
    %v177 = vunpack.c.l.b16 %v132
    %v178 = vunpack.c.l.b16 %v133
    %v179 = vunpack.c.l.b16 %v134
    %v180 = vunpack.c.l.b16 %v135
    %v181 = vunpack.c.l.b16 %v136
    %v182 = vunpack.c.l.b16 %v137
    %v183 = vunpack.c.l.b16 %v138
    %v184 = vunpack.c.l.b16 %v139
    %v185 = vpack.c.b16 %v170, %v169
    %v186 = vpack.c.b16 %v172, %v171
    %v187 = vpack.c.b16 %v174, %v173
    %v188 = vpack.c.b16 %v176, %v175
    %v189 = vpack.c.b16 %v178, %v177
    %v190 = vpack.c.b16 %v180, %v179
    %v191 = vpack.c.b16 %v182, %v181
    %v192 = vpack.c.b16 %v184, %v183
    %201 = vmatprep.subr.bf16.mxu0 0
    %202 = vmatpush1.bf16.msra.mxu0 %v185
    %203 = vmatprep.subr.bf16.mxu0 0
    %204 = vmatpush1.bf16.msra.mxu0 %v186
    %205 = vmatprep.subr.bf16.mxu0 0
    %206 = vmatpush1.bf16.msra.mxu0 %v187
    %207 = vmatprep.subr.bf16.mxu0 0
    %208 = vmatpush1.bf16.msra.mxu0 %v188
    %209 = vmatprep.subr.bf16.mxu0 0
    %210 = vmatpush1.bf16.msra.mxu0 %v189
    %211 = vmatprep.subr.bf16.mxu0 0
    %212 = vmatpush1.bf16.msra.mxu0 %v190
    %213 = vmatprep.subr.bf16.mxu0 0
    %214 = vmatpush1.bf16.msra.mxu0 %v191
    %215 = vmatprep.subr.bf16.mxu0 0
    %216 = vmatpush1.bf16.msra.mxu0 %v192
    %217 = vmatprep.subr.bf16.mxu0 0
    %218 = vmatpush1.bf16.msra.mxu0 0
    %219 = vmatprep.subr.bf16.mxu0 0
    %220 = vmatpush1.bf16.msra.mxu0 0
    %221 = vmatprep.subr.bf16.mxu0 0
    %222 = vmatpush1.bf16.msra.mxu0 0
    %223 = vmatprep.subr.bf16.mxu0 0
    %224 = vmatpush1.bf16.msra.mxu0 0
    %225 = vmatprep.subr.bf16.mxu0 0
    %226 = vmatpush1.bf16.msra.mxu0 0
    %227 = vmatprep.subr.bf16.mxu0 0
    %228 = vmatpush1.bf16.msra.mxu0 0
    %229 = vmatprep.subr.bf16.mxu0 0
    %230 = vmatpush1.bf16.msra.mxu0 0
    %231 = vmatprep.subr.bf16.mxu0 0
    %232 = vmatpush1.bf16.msra.mxu0 0
    %233 = vmatprep.mubr.bf16.mxu0 0
    %234 = vmatmul.mubr.bf16.gmra.mrb[0].mxu0 %v151
    %v235 = vpop.f32.mrb[0].mxu0
    %v236 = vadd.f32 %v145, %v235
    %v237 = vpop.f32.mrb[0].mxu0
    %v238 = vpop.f32.mrb[0].mxu0
    %v239 = vadd.f32 %v145, %v238
    %v240 = vpop.f32.mrb[0].mxu0
    %241 = vdwg.mxu0
    %v242 = vmax.f32 %v236, 0.0
    %v243 = vmax.f32 %v239, 0.0
    %v244 = vpack.c.bf16 %v243, %v242
    %v245 = vld [vmem:[#allocation8] sm:$0xff]
    %v246 = vld [vmem:[#allocation8 + $0x8] sm:$0xff]
    %v247 = vld [vmem:[#allocation8 + $0x10] sm:$0xff]
    %v248 = vld [vmem:[#allocation8 + $0x18] sm:$0xff]
    %v249 = vld [vmem:[#allocation8 + $0x20] sm:$0xff]
    %v250 = vld [vmem:[#allocation8 + $0x28] sm:$0xff]
    %v251 = vld [vmem:[#allocation8 + $0x30] sm:$0xff]
    %v252 = vld [vmem:[#allocation8 + $0x38] sm:$0xff]
    %v253 = vld [vmem:[#allocation8 + $0x40] sm:$0xff]
    %v254 = vld [vmem:[#allocation8 + $0x48] sm:$0xff]
    %v255 = vld [vmem:[#allocation8 + $0x50] sm:$0xff]
    %v256 = vld [vmem:[#allocation8 + $0x58] sm:$0xff]
    %v257 = vld [vmem:[#allocation8 + $0x60] sm:$0xff]
    %v258 = vld [vmem:[#allocation8 + $0x68] sm:$0xff]
    %v259 = vld [vmem:[#allocation8 + $0x70] sm:$0xff]
    %v260 = vld [vmem:[#allocation8 + $0x78] sm:$0xff]
    %v261 = vld [vmem:[%s5] sm:$0x3]
    %v263 = vlaneseq
    %v264 = vshrl.u32 %v263, 7
    %v265 = vsub.s32 0, %v264
    %v266 = vrot.slane %v261, %v265
    %v267 = vlaneseq
    %v268 = vshrl.u32 %v267, 7
    %v269 = vsub.s32 1, %v268
    %v270 = vrot.slane %v261, %v269
    %v289 = vunpack.c.l.b16 %v245
    %v290 = vunpack.c.h.b16 %v245
    %v291 = vunpack.c.l.b16 %v246
    %v292 = vunpack.c.h.b16 %v246
    %v293 = vunpack.c.l.b16 %v247
    %v294 = vunpack.c.h.b16 %v247
    %v295 = vunpack.c.l.b16 %v248
    %v296 = vunpack.c.h.b16 %v248
    %v297 = vunpack.c.l.b16 %v249
    %v298 = vunpack.c.h.b16 %v249
    %v299 = vunpack.c.l.b16 %v250
    %v300 = vunpack.c.h.b16 %v250
    %v301 = vunpack.c.l.b16 %v251
    %v302 = vunpack.c.h.b16 %v251
    %v303 = vunpack.c.l.b16 %v252
    %v304 = vunpack.c.h.b16 %v252
    %v305 = vunpack.c.l.b16 %v253
    %v306 = vunpack.c.h.b16 %v253
    %v307 = vunpack.c.l.b16 %v254
    %v308 = vunpack.c.h.b16 %v254
    %v309 = vunpack.c.l.b16 %v255
    %v310 = vunpack.c.h.b16 %v255
    %v311 = vunpack.c.l.b16 %v256
    %v312 = vunpack.c.h.b16 %v256
    %v313 = vunpack.c.l.b16 %v257
    %v314 = vunpack.c.h.b16 %v257
    %v315 = vunpack.c.l.b16 %v258
    %v316 = vunpack.c.h.b16 %v258
    %v317 = vunpack.c.l.b16 %v259
    %v318 = vunpack.c.h.b16 %v259
    %v319 = vunpack.c.l.b16 %v260
    %v320 = vunpack.c.h.b16 %v260
    %v321 = vpack.c.b16 %v291, %v289
    %v322 = vpack.c.b16 %v292, %v290
    %v323 = vpack.c.b16 %v295, %v293
    %v324 = vpack.c.b16 %v296, %v294
    %v325 = vpack.c.b16 %v299, %v297
    %v326 = vpack.c.b16 %v300, %v298
    %v327 = vpack.c.b16 %v303, %v301
    %v328 = vpack.c.b16 %v304, %v302
    %v329 = vpack.c.b16 %v307, %v305
    %v330 = vpack.c.b16 %v308, %v306
    %v331 = vpack.c.b16 %v311, %v309
    %v332 = vpack.c.b16 %v312, %v310
    %v333 = vpack.c.b16 %v315, %v313
    %v334 = vpack.c.b16 %v316, %v314
    %v335 = vpack.c.b16 %v319, %v317
    %v336 = vpack.c.b16 %v320, %v318
    %353 = vmatprep.subr.bf16.mxu0 %v322
    %354 = vmatpush1.bf16.msra.mxu0 %v321
    %355 = vmatprep.subr.bf16.mxu0 %v324
    %356 = vmatpush1.bf16.msra.mxu0 %v323
    %357 = vmatprep.subr.bf16.mxu0 %v326
    %358 = vmatpush1.bf16.msra.mxu0 %v325
    %359 = vmatprep.subr.bf16.mxu0 %v328
    %360 = vmatpush1.bf16.msra.mxu0 %v327
    %361 = vmatprep.subr.bf16.mxu0 %v330
    %362 = vmatpush1.bf16.msra.mxu0 %v329
    %363 = vmatprep.subr.bf16.mxu0 %v332
    %364 = vmatpush1.bf16.msra.mxu0 %v331
    %365 = vmatprep.subr.bf16.mxu0 %v334
    %366 = vmatpush1.bf16.msra.mxu0 %v333
    %367 = vmatprep.subr.bf16.mxu0 %v336
    %368 = vmatpush1.bf16.msra.mxu0 %v335
    %369 = vmatprep.subr.bf16.mxu0 0
    %370 = vmatpush1.bf16.msra.mxu0 0
    %371 = vmatprep.subr.bf16.mxu0 0
    %372 = vmatpush1.bf16.msra.mxu0 0
    %373 = vmatprep.subr.bf16.mxu0 0
    %374 = vmatpush1.bf16.msra.mxu0 0
    %375 = vmatprep.subr.bf16.mxu0 0
    %376 = vmatpush1.bf16.msra.mxu0 0
    %377 = vmatprep.subr.bf16.mxu0 0
    %378 = vmatpush1.bf16.msra.mxu0 0
    %379 = vmatprep.subr.bf16.mxu0 0
    %380 = vmatpush1.bf16.msra.mxu0 0
    %381 = vmatprep.subr.bf16.mxu0 0
    %382 = vmatpush1.bf16.msra.mxu0 0
    %383 = vmatprep.subr.bf16.mxu0 0
    %384 = vmatpush1.bf16.msra.mxu0 0
    %385 = vmatprep.mubr.bf16.mxu0 0
    %386 = vmatmul.mubr.bf16.gmra.mrb[0].mxu0 %v244
    %v387 = vpop.f32.mrb[0].mxu0
    %v388 = vadd.f32 %v266, %v387
    %v389 = vpop.f32.mrb[0].mxu0
    %v390 = vadd.f32 %v270, %v389
    %v391 = vpop.f32.mrb[0].mxu0
    %v392 = vadd.f32 %v266, %v391
    %v393 = vpop.f32.mrb[0].mxu0
    %v394 = vadd.f32 %v270, %v393
    %395 = vdwg.mxu0
    %v396 = vld [vmem:[#allocation5] sm:$0xff]
    %v397 = vld [vmem:[#allocation5 + $0x8] sm:$0xff]
    %v398 = vmul.f32 %v390, 0.5
    %v399 = vmul.f32 %v394, 0.5
    %v400 = vmul.f32 %v398, 1.442695
    %v401 = vpow.pop %v400
    %v402 = vmul.f32 %v399, 1.442695
    %v403 = vpow.pop %v402
    %v404 = vmul.f32 %v396, %v401
    %v405 = vmul.f32 %v397, %v403
    %v406 = vadd.f32 %v388, %v404
    %v407 = vadd.f32 %v392, %v405
    %v408 = vpack.c.bf16 %v407, %v406
    %v409 = vld [vmem:[#allocation10] sm:$0xf]
    %v410 = vld [vmem:[#allocation10 + $0x4] sm:$0xf]
    %v411 = vld [vmem:[#allocation10 + $0x8] sm:$0xf]
    %v412 = vld [vmem:[#allocation10 + $0xc] sm:$0xf]
    %v413 = vld [vmem:[#allocation10 + $0x10] sm:$0xf]
    %v414 = vld [vmem:[#allocation10 + $0x14] sm:$0xf]
    %v415 = vld [vmem:[#allocation10 + $0x18] sm:$0xf]
    %v416 = vld [vmem:[#allocation10 + $0x1c] sm:$0xf]
    %v417 = vld [vmem:[#allocation10 + $0x20] sm:$0xf]
    %v418 = vld [vmem:[#allocation10 + $0x24] sm:$0xf]
    %v419 = vld [vmem:[#allocation10 + $0x28] sm:$0xf]
    %v420 = vld [vmem:[#allocation10 + $0x2c] sm:$0xf]
    %v421 = vld [vmem:[#allocation10 + $0x30] sm:$0xf]
    %v422 = vld [vmem:[#allocation10 + $0x34] sm:$0xf]
    %v423 = vld [vmem:[#allocation10 + $0x38] sm:$0xf]
    %v424 = vld [vmem:[#allocation10 + $0x3c] sm:$0xf]
    %v425 = vld [vmem:[%s7] sm:$0x1]
    %v427 = vlaneseq
    %v428 = vshrl.u32 %v427, 7
    %v429 = vsub.s32 0, %v428
    %v430 = vrot.slane %v425, %v429
    %v448 = vunpack.c.l.b16 %v409
    %v449 = vunpack.c.l.b16 %v410
    %v450 = vunpack.c.l.b16 %v411
    %v451 = vunpack.c.l.b16 %v412
    %v452 = vunpack.c.l.b16 %v413
    %v453 = vunpack.c.l.b16 %v414
    %v454 = vunpack.c.l.b16 %v415
    %v455 = vunpack.c.l.b16 %v416
    %v456 = vunpack.c.l.b16 %v417
    %v457 = vunpack.c.l.b16 %v418
    %v458 = vunpack.c.l.b16 %v419
    %v459 = vunpack.c.l.b16 %v420
    %v460 = vunpack.c.l.b16 %v421
    %v461 = vunpack.c.l.b16 %v422
    %v462 = vunpack.c.l.b16 %v423
    %v463 = vunpack.c.l.b16 %v424
    %v464 = vpack.c.b16 %v449, %v448
    %v465 = vpack.c.b16 %v451, %v450
    %v466 = vpack.c.b16 %v453, %v452
    %v467 = vpack.c.b16 %v455, %v454
    %v468 = vpack.c.b16 %v457, %v456
    %v469 = vpack.c.b16 %v459, %v458
    %v470 = vpack.c.b16 %v461, %v460
    %v471 = vpack.c.b16 %v463, %v462
    %480 = vmatprep.subr.bf16.mxu0 0
    %481 = vmatpush1.bf16.msra.mxu0 %v464
    %482 = vmatprep.subr.bf16.mxu0 0
    %483 = vmatpush1.bf16.msra.mxu0 %v465
    %484 = vmatprep.subr.bf16.mxu0 0
    %485 = vmatpush1.bf16.msra.mxu0 %v466
    %486 = vmatprep.subr.bf16.mxu0 0
    %487 = vmatpush1.bf16.msra.mxu0 %v467
    %488 = vmatprep.subr.bf16.mxu0 0
    %489 = vmatpush1.bf16.msra.mxu0 %v468
    %490 = vmatprep.subr.bf16.mxu0 0
    %491 = vmatpush1.bf16.msra.mxu0 %v469
    %492 = vmatprep.subr.bf16.mxu0 0
    %493 = vmatpush1.bf16.msra.mxu0 %v470
    %494 = vmatprep.subr.bf16.mxu0 0
    %495 = vmatpush1.bf16.msra.mxu0 %v471
    %496 = vmatprep.subr.bf16.mxu0 0
    %497 = vmatpush1.bf16.msra.mxu0 0
    %498 = vmatprep.subr.bf16.mxu0 0
    %499 = vmatpush1.bf16.msra.mxu0 0
    %500 = vmatprep.subr.bf16.mxu0 0
    %501 = vmatpush1.bf16.msra.mxu0 0
    %502 = vmatprep.subr.bf16.mxu0 0
    %503 = vmatpush1.bf16.msra.mxu0 0
    %504 = vmatprep.subr.bf16.mxu0 0
    %505 = vmatpush1.bf16.msra.mxu0 0
    %506 = vmatprep.subr.bf16.mxu0 0
    %507 = vmatpush1.bf16.msra.mxu0 0
    %508 = vmatprep.subr.bf16.mxu0 0
    %509 = vmatpush1.bf16.msra.mxu0 0
    %510 = vmatprep.subr.bf16.mxu0 0
    %511 = vmatpush1.bf16.msra.mxu0 0
    %512 = vmatprep.mubr.bf16.mxu0 0
    %513 = vmatmul.mubr.bf16.gmra.mrb[0].mxu0 %v408
    %v514 = vpop.f32.mrb[0].mxu0
    %v515 = vadd.f32 %v430, %v514
    %v516 = vpop.f32.mrb[0].mxu0
    %v517 = vpop.f32.mrb[0].mxu0
    %v518 = vadd.f32 %v430, %v517
    %v519 = vpop.f32.mrb[0].mxu0
    %520 = vdwg.mxu0
    %v521 = vmax.f32 %v515, 0.0
    %v522 = vmax.f32 %v518, 0.0
    %v523 = vpack.c.bf16 %v522, %v521
    %v524 = vld [vmem:[#allocation11] sm:$0xf]
    %v525 = vld [vmem:[#allocation11 + $0x4] sm:$0xf]
    %v526 = vld [vmem:[#allocation11 + $0x8] sm:$0xf]
    %v527 = vld [vmem:[#allocation11 + $0xc] sm:$0xf]
    %v528 = vld [vmem:[#allocation11 + $0x10] sm:$0xf]
    %v529 = vld [vmem:[#allocation11 + $0x14] sm:$0xf]
    %v530 = vld [vmem:[#allocation11 + $0x18] sm:$0xf]
    %v531 = vld [vmem:[#allocation11 + $0x1c] sm:$0xf]
    %v532 = vld [vmem:[#allocation11 + $0x20] sm:$0xf]
    %v533 = vld [vmem:[#allocation11 + $0x24] sm:$0xf]
    %v534 = vld [vmem:[#allocation11 + $0x28] sm:$0xf]
    %v535 = vld [vmem:[#allocation11 + $0x2c] sm:$0xf]
    %v536 = vld [vmem:[#allocation11 + $0x30] sm:$0xf]
    %v537 = vld [vmem:[#allocation11 + $0x34] sm:$0xf]
    %v538 = vld [vmem:[#allocation11 + $0x38] sm:$0xf]
    %v539 = vld [vmem:[#allocation11 + $0x3c] sm:$0xf]
    %v540 = vld [vmem:[%s9] sm:$0x1]
    %v542 = vlaneseq
    %v543 = vshrl.u32 %v542, 7
    %v544 = vsub.s32 0, %v543
    %v545 = vrot.slane %v540, %v544
    %v563 = vunpack.c.l.b16 %v524
    %v564 = vunpack.c.l.b16 %v525
    %v565 = vunpack.c.l.b16 %v526
    %v566 = vunpack.c.l.b16 %v527
    %v567 = vunpack.c.l.b16 %v528
    %v568 = vunpack.c.l.b16 %v529
    %v569 = vunpack.c.l.b16 %v530
    %v570 = vunpack.c.l.b16 %v531
    %v571 = vunpack.c.l.b16 %v532
    %v572 = vunpack.c.l.b16 %v533
    %v573 = vunpack.c.l.b16 %v534
    %v574 = vunpack.c.l.b16 %v535
    %v575 = vunpack.c.l.b16 %v536
    %v576 = vunpack.c.l.b16 %v537
    %v577 = vunpack.c.l.b16 %v538
    %v578 = vunpack.c.l.b16 %v539
    %v579 = vpack.c.b16 %v564, %v563
    %v580 = vpack.c.b16 %v566, %v565
    %v581 = vpack.c.b16 %v568, %v567
    %v582 = vpack.c.b16 %v570, %v569
    %v583 = vpack.c.b16 %v572, %v571
    %v584 = vpack.c.b16 %v574, %v573
    %v585 = vpack.c.b16 %v576, %v575
    %v586 = vpack.c.b16 %v578, %v577
    %595 = vmatprep.subr.bf16.mxu0 0
    %596 = vmatpush1.bf16.msra.mxu0 %v579
    %597 = vmatprep.subr.bf16.mxu0 0
    %598 = vmatpush1.bf16.msra.mxu0 %v580
    %599 = vmatprep.subr.bf16.mxu0 0
    %600 = vmatpush1.bf16.msra.mxu0 %v581
    %601 = vmatprep.subr.bf16.mxu0 0
    %602 = vmatpush1.bf16.msra.mxu0 %v582
    %603 = vmatprep.subr.bf16.mxu0 0
    %604 = vmatpush1.bf16.msra.mxu0 %v583
    %605 = vmatprep.subr.bf16.mxu0 0
    %606 = vmatpush1.bf16.msra.mxu0 %v584
    %607 = vmatprep.subr.bf16.mxu0 0
    %608 = vmatpush1.bf16.msra.mxu0 %v585
    %609 = vmatprep.subr.bf16.mxu0 0
    %610 = vmatpush1.bf16.msra.mxu0 %v586
    %611 = vmatprep.subr.bf16.mxu0 0
    %612 = vmatpush1.bf16.msra.mxu0 0
    %613 = vmatprep.subr.bf16.mxu0 0
    %614 = vmatpush1.bf16.msra.mxu0 0
    %615 = vmatprep.subr.bf16.mxu0 0
    %616 = vmatpush1.bf16.msra.mxu0 0
    %617 = vmatprep.subr.bf16.mxu0 0
    %618 = vmatpush1.bf16.msra.mxu0 0
    %619 = vmatprep.subr.bf16.mxu0 0
    %620 = vmatpush1.bf16.msra.mxu0 0
    %621 = vmatprep.subr.bf16.mxu0 0
    %622 = vmatpush1.bf16.msra.mxu0 0
    %623 = vmatprep.subr.bf16.mxu0 0
    %624 = vmatpush1.bf16.msra.mxu0 0
    %625 = vmatprep.subr.bf16.mxu0 0
    %626 = vmatpush1.bf16.msra.mxu0 0
    %627 = vmatprep.mubr.bf16.mxu0 0
    %628 = vmatmul.mubr.bf16.gmra.mrb[0].mxu0 %v523
    %v629 = vpop.f32.mrb[0].mxu0
    %v630 = vadd.f32 %v545, %v629
    %v631 = vpop.f32.mrb[0].mxu0
    %v632 = vpop.f32.mrb[0].mxu0
    %v633 = vadd.f32 %v545, %v632
    %v634 = vpop.f32.mrb[0].mxu0
    %635 = vdwg.mxu0
    %v636 = vxor.u32 %v630, 2147483648
    %v637 = vxor.u32 %v633, 2147483648
    %v638 = vmul.f32 %v636, 1.442695
    %v639 = vpow.pop %v638
    %v640 = vmul.f32 %v637, 1.442695
    %v641 = vpow.pop %v640
    %v642 = vadd.f32 %v639, 1.0
    %v643 = vadd.f32 %v641, 1.0
    %v644 = vrcp.pop %v642
    %v645 = vmul.f32 1.0, %v644
    %v646 = vrcp.pop %v643
    %v647 = vmul.f32 1.0, %v646
    %648 = vst [vmem:[#allocation13] sm:$0xff] %v645
    %649 = vst [vmem:[#allocation13 + $0x8] sm:$0xff] %v647
    %650 = vst [vmem:[#allocation14] sm:$0xff] %v388
    %651 = vst [vmem:[#allocation14 + $0x8] sm:$0xff] %v390
    %652 = vst [vmem:[#allocation14 + $0x10] sm:$0xff] %v392
    %653 = vst [vmem:[#allocation14 + $0x18] sm:$0xff] %v394
    // Predicated region
    $region66: #{tpu_custom_call.1} parent=1 // pred_check
      _
    $region67: #{tpu_custom_call.1} parent=1 // pred_check_branch
      %655 = sbr.rel (0) target = $region69
    $region68: #{tpu_custom_call.1} parent=1 // pred_region
      %s657 = ssub.s32 256, 256
      %658 = vsyncadd [#allocation4], %s657
      %s659 = sshll.u32 [#allocation13], 4
      %s660 = int_to_ptr.vmem [resolvable:$true] %s659
      %665 = dma.vmem_to_hbm [thread:$0]  %s660, 256, %s10, [#allocation4], 128, 128, 8
    $region69: #{tpu_custom_call.1} parent=1 // pred_fallthru
      _
    // Predicated region
    $region70: #{tpu_custom_call.1} parent=1 // pred_check
      _
    $region71: #{tpu_custom_call.1} parent=1 // pred_check_branch
      %667 = sbr.rel (0) target = $region73
    $region72: #{tpu_custom_call.1} parent=1 // pred_region
      %s669 = ssub.s32 512, 512
      %670 = vsyncadd [#allocation15], %s669
      %s671 = sshll.u32 [#allocation14], 4
      %s672 = int_to_ptr.vmem [resolvable:$true] %s671
      %677 = dma.vmem_to_hbm [thread:$0]  %s672, 512, %s11, [#allocation15], 256, 256, 16
    $region73: #{tpu_custom_call.1} parent=1 // pred_fallthru
      _
    // Predicated region
    $region74: #{tpu_custom_call.1} parent=1 // pred_check
      _
    $region75: #{tpu_custom_call.1} parent=1 // pred_check_branch
      %679 = sbr.rel (0) target = $region77
    $region76: #{tpu_custom_call.1} parent=1 // pred_region
      %680 = dma.done [#allocation4], 256
    $region77: #{tpu_custom_call.1} parent=1 // pred_fallthru
      _
    // Predicated region
    $region78: #{tpu_custom_call.1} parent=1 // pred_check
      _
    $region79: #{tpu_custom_call.1} parent=1 // pred_check_branch
      %682 = sbr.rel (0) target = $region81
    $region80: #{tpu_custom_call.1} parent=1 // pred_region
      %683 = dma.done [#allocation15], 512
    $region81: #{tpu_custom_call.1} parent=1 // pred_fallthru
      _
    %684 = vsyncpa [#allocation3], 1
    %685 = vsyncpa [#allocation6], 1
    %686 = vsyncpa [#allocation9], 1
    %687 = vsyncpa [#allocation12], 1
    %688 = vsyncpa [#allocation4], 1
    %689 = vsyncpa [#allocation15], 1

</llo_original>
